<compile_context>
chip_gen: v6e
topology: v6e:2x2x1
jax: 0.10.0
libtpu: 0.0.40
codegen_flags: <defaults>
</compile_context>

<pallas_src>
import functools

import jax
import jax.numpy as jnp
from jax.experimental import pallas as pl
from jax.experimental.pallas import tpu as pltpu

_MiB = 1024 * 1024


def _vmem_cap_bytes():
    """Physical VMEM capacity of the local TPU generation (fallback: v7x)."""
    try:
        info = pltpu.get_tpu_info()
        cap = int(getattr(info, "vmem_capacity_bytes", 0))
        if cap > 0:
            return cap
    except Exception:
        pass
    return 64 * _MiB  # conservative: v7x per-TensorCore VMEM


def _choose_spatial_tile(hw, c, itemsize, target_bytes):
    """Largest 128-multiple spatial tile with block bytes near target_bytes.

    Never returns an unbounded full-extent block: if no clean divisor of hw
    exists near the target, the tile simply does not divide hw and the ragged
    tail is handled by in-kernel masking (phase 1) / Pallas OOB write masking
    (phase 2)."""
    if c * hw * itemsize <= target_bytes:
        return hw                                   # whole extent is small
    t = max(128, (target_bytes // (c * itemsize)) // 128 * 128)
    t = min(t, -(-hw // 128) * 128)
    # Prefer a nearby divisor of hw (avoids wasted ragged-tail work), but do
    # not shrink below half the target tile for it.
    for cand in range(t, 0, -128):
        if hw % cand == 0:
            if 2 * cand >= t:
                return cand
            break
    return t


# -------------------------- phase 1: per-channel sum / max over spatial -----
def _caf_stats_kernel(x_ref, stats_ref, sum_acc, max_acc, *, hw, ts, n_sp, ragged):
    s = pl.program_id(2)

    @pl.when(s == 0)
    def _():
        sum_acc[...] = jnp.zeros_like(sum_acc)
        max_acc[...] = jnp.full_like(max_acc, -jnp.inf)

    xt = x_ref[0].astype(jnp.float32)                       # (C, ts)
    if ragged:
        # Mask columns past the real spatial extent (padded DMA garbage).
        start = (pl.program_id(1) * n_sp + s) * ts
        col = jax.lax.broadcasted_iota(jnp.int32, xt.shape, 1) + start
        valid = col < hw
        x_sum = jnp.where(valid, xt, 0.0)
        x_max = jnp.where(valid, xt, -jnp.inf)
    else:
        x_sum = xt
        x_max = xt
    sum_acc[...] += jnp.sum(x_sum, axis=1, keepdims=True)
    max_acc[...] = jnp.maximum(max_acc[...], jnp.max(x_max, axis=1, keepdims=True))

    @pl.when(s == pl.num_programs(2) - 1)
    def _():
        # (C, 2): col 0 = raw sum, col 1 = max (combined / scaled in XLA).
        stats_ref[0, 0] = jnp.concatenate([sum_acc[...], max_acc[...]], axis=1)


# -------------------------- phase 2: out = y * p -----------------------------
def _caf_apply_kernel(y_ref, p_ref, o_ref):
    o_ref[0] = y_ref[0] * p_ref[0]                          # (C, ts) * (C, 1)


# ------------------------------------------------------------------ wrapper --
def caf_forward(x_nchw, y_nchw, w1, w2, *, spatial_tile=None):
    """x, y: (B, C, H, W).  w1: (C//r, C), w2: (C, C//r) (PyTorch Linear layout)."""
    B, C, H, W = x_nchw.shape
    assert y_nchw.shape == x_nchw.shape, "kernel assumes x and y share shape"
    hid, c_in = w1.shape
    assert c_in == C and w2.shape == (C, hid)
    HW = H * W
    in_dtype = x_nchw.dtype
    itemsize = jnp.dtype(in_dtype).itemsize
    cap = _vmem_cap_bytes()

    # Free views — no HBM transposes.
    x = x_nchw.reshape(B, C, HW)
    y = y_nchw.reshape(B, C, HW)

    # ---------------------------- phase 1 tiling ----------------------------
    if spatial_tile is not None:
        ts1 = int(spatial_tile)
        assert ts1 == HW or ts1 % 128 == 0, "spatial_tile must be full extent or 128-multiple"
    else:
        # Only x is double-buffered in phase 1 -> big (~8 MiB) tiles.
        ts1 = _choose_spatial_tile(HW, C, itemsize, min(8 * _MiB, cap // 8))
    n_s = -(-HW // ts1)
    ragged = (HW % ts1) != 0
    # With B == 1 the batch 'parallel' axis cannot feed both v7x TensorCores:
    # split the spatial reduction into 2 independent partial reductions.
    n_par = 2 if (B == 1 and n_s >= 2 and n_s % 2 == 0) else 1
    n_sp = n_s // n_par

    vmem1 = int(min(cap - 8 * _MiB,
                    max(32 * _MiB, 2 * C * ts1 * itemsize + 4 * _MiB)))

    stats = pl.pallas_call(
        functools.partial(_caf_stats_kernel, hw=HW, ts=ts1, n_sp=n_sp, ragged=ragged),
        out_shape=jax.ShapeDtypeStruct((B, n_par, C, 2), jnp.float32),
        grid_spec=pltpu.PrefetchScalarGridSpec(
            num_scalar_prefetch=0,
            grid=(B, n_par, n_sp),
            in_specs=[pl.BlockSpec((1, C, ts1), lambda b, g, s: (b, 0, g * n_sp + s))],
            out_specs=pl.BlockSpec((1, 1, C, 2), lambda b, g, s: (b, g, 0, 0)),
            scratch_shapes=[
                pltpu.VMEM((C, 1), jnp.float32),   # running sum
                pltpu.VMEM((C, 1), jnp.float32),   # running max
            ],
        ),
        compiler_params=pltpu.CompilerParams(
            dimension_semantics=("parallel", "parallel", "arbitrary"),
            vmem_limit_bytes=vmem1,
        ),
        cost_estimate=pl.CostEstimate(
            flops=int(2 * B * C * HW),
            transcendentals=0,
            bytes_accessed=int(B * C * HW * itemsize + B * n_par * C * 2 * 4),
        ),
    )(x)

    # --------------- channel MLP: tiny batched GEMM, plain XLA --------------
    mean = jnp.sum(stats[..., 0], axis=1) * (1.0 / float(HW))   # (B, C)
    mx = jnp.max(stats[..., 1], axis=1)                         # (B, C)

    def fc(v):
        h = jnp.maximum(v @ w1.T, 0.0)
        return jax.nn.sigmoid(h @ w2.T)

    p = (fc(mean) + fc(mx)).astype(in_dtype).reshape(B, C, 1)

    # ---------------------------- phase 2 tiling ----------------------------
    if spatial_tile is not None:
        ts2 = int(spatial_tile)
    else:
        # y + out double-buffered -> smaller (~4 MiB) tiles.
        ts2 = _choose_spatial_tile(HW, C, itemsize, min(4 * _MiB, cap // 12))
    n_s2 = -(-HW // ts2)
    vmem2 = int(min(cap - 8 * _MiB,
                    max(32 * _MiB, 4 * C * ts2 * itemsize + 4 * _MiB)))

    out = pl.pallas_call(
        _caf_apply_kernel,
        out_shape=jax.ShapeDtypeStruct((B, C, HW), in_dtype),
        grid_spec=pltpu.PrefetchScalarGridSpec(
            num_scalar_prefetch=0,
            grid=(B, n_s2),
            in_specs=[
                pl.BlockSpec((1, C, ts2), lambda b, s: (b, 0, s)),
                pl.BlockSpec((1, C, 1), lambda b, s: (b, 0, 0)),
            ],
            out_specs=pl.BlockSpec((1, C, ts2), lambda b, s: (b, 0, s)),
        ),
        compiler_params=pltpu.CompilerParams(
            dimension_semantics=("parallel", "parallel"),
            vmem_limit_bytes=vmem2,
        ),
        cost_estimate=pl.CostEstimate(
            flops=int(B * C * HW),
            transcendentals=0,
            bytes_accessed=int((2 * B * C * HW + B * C) * itemsize),
        ),
    )(y, p)
    return out.reshape(B, C, H, W)


# ---------------------------------------------------------------- reference -
def caf_reference(x, y, w1, w2):
    """Pure-JAX reference mirroring the PyTorch forward (NCHW)."""
    m = jnp.mean(x, axis=(2, 3))
    n = jnp.max(x, axis=(2, 3))

    def fc(v):
        h = jnp.maximum(v @ w1.T, 0.0)
        return jax.nn.sigmoid(h @ w2.T)

    p = (fc(m) + fc(n))[:, :, None, None]
    return y * p


if __name__ == "__main__":
    key = jax.random.PRNGKey(0)
    k_w1, k_w2, *ks = jax.random.split(key, 8)

    C, reduction = 512, 16             # the module's fc hard-codes 512
    hid = C // reduction               # 32

    # deterministic synthetic weights (PyTorch Linear layout: (out, in))
    w1 = jax.random.normal(k_w1, (hid, C), dtype=jnp.float32) * 0.05
    w2 = jax.random.normal(k_w2, (C, hid), dtype=jnp.float32) * 0.05

    def check(B, H, W, kx, ky, **kw):
        x = jax.random.normal(kx, (B, C, H, W), dtype=jnp.float32)
        y = jax.random.normal(ky, (B, C, H, W), dtype=jnp.float32)
        out = jax.block_until_ready(caf_forward(x, y, w1, w2, **kw))
        ref = jax.block_until_ready(caf_reference(x, y, w1, w2))
        assert out.shape == x.shape
        assert jnp.allclose(out, ref, atol=2e-5, rtol=1e-5), f"mismatch {B}x{H}x{W} {kw}"

    # small spatial: single tile per batch element
    check(2, 8, 8, ks[0], ks[1])
    # ragged spatial tiling: HW=324, tile=128 -> 3 tiles, last one masked
    check(2, 18, 18, ks[2], ks[3], spatial_tile=128)
    # B == 1: 2-way parallel partial spatial reduction (v7x dual-TC path)
    check(1, 32, 32, ks[4], ks[5], spatial_tile=128)

    print("KERNEL_OK")
</pallas_src>

<mosaic_0001>
module attributes {stable_mosaic.version = 11 : i64} {
  func.func @_caf_stats_kernel(%arg0: i32, %arg1: i32, %arg2: i32, %arg3: memref<1x512x64xf32, #tpu.memory_space<vmem>>, %arg4: memref<1x1x512x2xf32, #tpu.memory_space<vmem>>, %arg5: memref<512x1xf32, #tpu.memory_space<vmem>>, %arg6: memref<512x1xf32, #tpu.memory_space<vmem>>) attributes {dimension_semantics = [#tpu.dimension_semantics<parallel>, #tpu.dimension_semantics<parallel>, #tpu.dimension_semantics<arbitrary>], iteration_bounds = array<i64: 2, 1, 1>, scalar_prefetch = 0 : i64, scratch_operands = 2 : i64, tpu.core_type = #tpu.core_type<tc>, window_params = [{transform_indices = @transform_0, window_bounds = array<i64: 1, 512, 64>}, {transform_indices = @transform_1, window_bounds = array<i64: 1, 1, 512, 2>}]} {
    %c0_i32 = arith.constant 0 : i32
    %0 = arith.cmpi eq, %arg2, %c0_i32 : i32
    %1 = arith.extui %0 : i1 to i32
    %c0_i32_0 = arith.constant 0 : i32
    %2 = arith.cmpi ne, %1, %c0_i32_0 : i32
    scf.if %2 {
      %cst_14 = arith.constant 0.000000e+00 : f32
      %18 = vector.broadcast %cst_14 : f32 to vector<512x1xf32>
      %c0_15 = arith.constant 0 : index
      %c0_16 = arith.constant 0 : index
      %19 = vector.load %arg5[%c0_15, %c0_16] : memref<512x1xf32, #tpu.memory_space<vmem>>, vector<512x1xf32>
      tpu.vector_store %arg5[%c0_15, %c0_16], %18 {strides = array<i32>} : memref<512x1xf32, #tpu.memory_space<vmem>>, vector<512x1xf32>,
      %cst_17 = arith.constant 0xFF800000 : f32
      %20 = vector.broadcast %cst_17 : f32 to vector<512x1xf32>
      %c0_18 = arith.constant 0 : index
      %c0_19 = arith.constant 0 : index
      %21 = vector.load %arg6[%c0_18, %c0_19] : memref<512x1xf32, #tpu.memory_space<vmem>>, vector<512x1xf32>
      tpu.vector_store %arg6[%c0_18, %c0_19], %20 {strides = array<i32>} : memref<512x1xf32, #tpu.memory_space<vmem>>, vector<512x1xf32>,
    } else {
    }
    %c0 = arith.constant 0 : index
    %c0_1 = arith.constant 0 : index
    %c0_2 = arith.constant 0 : index
    %3 = vector.load %arg3[%c0, %c0_1, %c0_2] : memref<1x512x64xf32, #tpu.memory_space<vmem>>, vector<1x512x64xf32>
    %4 = vector.shape_cast %3 : vector<1x512x64xf32> to vector<512x64xf32>
    %c0_3 = arith.constant 0 : index
    %c0_4 = arith.constant 0 : index
    %5 = vector.load %arg5[%c0_3, %c0_4] : memref<512x1xf32, #tpu.memory_space<vmem>>, vector<512x1xf32>
    %cst = arith.constant dense<0.000000e+00> : vector<512xf32>
    %6 = vector.multi_reduction <add>, %4, %cst [1] : vector<512x64xf32> to vector<512xf32>
    %7 = vector.shape_cast %6 : vector<512xf32> to vector<512x1xf32>
    %8 = arith.addf %5, %7 : vector<512x1xf32>
    %c0_5 = arith.constant 0 : index
    %c0_6 = arith.constant 0 : index
    %9 = vector.load %arg5[%c0_5, %c0_6] : memref<512x1xf32, #tpu.memory_space<vmem>>, vector<512x1xf32>
    tpu.vector_store %arg5[%c0_5, %c0_6], %8 {strides = array<i32>} : memref<512x1xf32, #tpu.memory_space<vmem>>, vector<512x1xf32>,
    %c0_7 = arith.constant 0 : index
    %c0_8 = arith.constant 0 : index
    %10 = vector.load %arg6[%c0_7, %c0_8] : memref<512x1xf32, #tpu.memory_space<vmem>>, vector<512x1xf32>
    %cst_9 = arith.constant dense<0xFF800000> : vector<512xf32>
    %11 = vector.multi_reduction <maximumf>, %4, %cst_9 [1] : vector<512x64xf32> to vector<512xf32>
    %12 = vector.shape_cast %11 : vector<512xf32> to vector<512x1xf32>
    %13 = arith.maximumf %10, %12 : vector<512x1xf32>
    %c0_10 = arith.constant 0 : index
    %c0_11 = arith.constant 0 : index
    %14 = vector.load %arg6[%c0_10, %c0_11] : memref<512x1xf32, #tpu.memory_space<vmem>>, vector<512x1xf32>
    tpu.vector_store %arg6[%c0_10, %c0_11], %13 {strides = array<i32>} : memref<512x1xf32, #tpu.memory_space<vmem>>, vector<512x1xf32>,
    %c0_i32_12 = arith.constant 0 : i32
    %15 = arith.cmpi eq, %arg2, %c0_i32_12 : i32
    %16 = arith.extui %15 : i1 to i32
    %c0_i32_13 = arith.constant 0 : i32
    %17 = arith.cmpi ne, %16, %c0_i32_13 : i32
    scf.if %17 {
      %c0_14 = arith.constant 0 : index
      %c0_15 = arith.constant 0 : index
      %18 = vector.load %arg5[%c0_14, %c0_15] : memref<512x1xf32, #tpu.memory_space<vmem>>, vector<512x1xf32>
      %c0_16 = arith.constant 0 : index
      %c0_17 = arith.constant 0 : index
      %19 = vector.load %arg6[%c0_16, %c0_17] : memref<512x1xf32, #tpu.memory_space<vmem>>, vector<512x1xf32>
      %20 = tpu.concatenate %18, %19 in 1 : vector<512x1xf32>, vector<512x1xf32> -> vector<512x2xf32>
      %c0_18 = arith.constant 0 : index
      %c0_19 = arith.constant 0 : index
      %c0_20 = arith.constant 0 : index
      %c0_21 = arith.constant 0 : index
      %21 = vector.load %arg4[%c0_18, %c0_19, %c0_20, %c0_21] : memref<1x1x512x2xf32, #tpu.memory_space<vmem>>, vector<1x1x512x2xf32>
      %22 = vector.shape_cast %21 : vector<1x1x512x2xf32> to vector<512x2xf32>
      %23 = vector.shape_cast %20 : vector<512x2xf32> to vector<1x1x512x2xf32>
      tpu.vector_store %arg4[%c0_18, %c0_19, %c0_20, %c0_21], %23 {strides = array<i32>} : memref<1x1x512x2xf32, #tpu.memory_space<vmem>>, vector<1x1x512x2xf32>,
    } else {
    }
    return
  }
  func.func @transform_0(%arg0: i32, %arg1: i32, %arg2: i32) -> (i32, i32, i32) {
    %c1_i32 = arith.constant 1 : i32
    %0 = arith.muli %arg1, %c1_i32 : i32
    %1 = arith.addi %0, %arg2 : i32
    %c0_i32 = arith.constant 0 : i32
    %c0_i32_0 = arith.constant 0 : i32
    return %arg0, %c0_i32, %1 : i32, i32, i32
  }
  func.func @transform_1(%arg0: i32, %arg1: i32, %arg2: i32) -> (i32, i32, i32, i32) {
    %c0_i32 = arith.constant 0 : i32
    %c0_i32_0 = arith.constant 0 : i32
    %c0_i32_1 = arith.constant 0 : i32
    return %arg0, %arg1, %c0_i32, %c0_i32_0 : i32, i32, i32, i32
  }
}

</mosaic_0001>

<llo_original>
// kernel: tpu_custom_call.1
$region0: #{tpu_custom_call.1}
  #allocation0 [shape = 'u32[]', space=smem, size = 0x4, offset = 0x4, fixed_abs, tag = 'smem constant byte address 0x4 - core index']
  #allocation1 [shape = 'u32[144,128]{1,0:T(1,128)}', space=vmem, size = 0x12000, scoped, tag = 'internal scratch']
  #allocation2 [shape = 'f32[512,1]{1,0:T(8,128)}', space=vmem, size = 0x40000, scoped, tag = 'scratch operand']
  #allocation3 [shape = 'f32[512,1]{1,0:T(8,128)}', space=vmem, size = 0x40000, scoped, tag = 'scratch operand']
  %s0 = inlined_call_operand.vmem [shape: f32[2,512,64], index: 0, kind: input, shape index: {}]
  %s1 = inlined_call_operand.vmem [shape: f32[2,1,512,2], index: 1, kind: output, shape index: {}]
  %s2 = sld [smem:[#allocation0]]
  $region45: #{tpu_custom_call.1} parent=0
    _
  %s4 = ssub.s32 1, %s2
  %s5 = scalar_select 0, %s4, %s2
  loop: start=0, step=1, limit=4
  $region2: #{tpu_custom_call.1} parent=0 // loop_pre_header
    _
  $region3: #{tpu_custom_call.1} parent=0 // loop_header
    %s7 = sphi 0, %s11
    %p8 = scmp.ge.s32.totalorder %s7, 4
    %s14 = sphi 0, %s33
    %s15 = sphi 0, %s29
    %s16 = sphi 0, %s25
    %s17 = sphi 0, %s14
    %s18 = sphi 0, %s15
    %s19 = sphi 0, %s16
    %s20 = sphi 0, %s17
    %s21 = sphi 0, %s18
    %s22 = sphi 0, %s19
    %s40 = sphi 0, %s42
    %s43 = sphi 0, %s40
    %s44 = sphi 0, %s43
    %s60 = sphi 0, %s44
    %s68 = sphi 0, %s70
    %s71 = sphi 0, %s68
    %s72 = sphi 0, %s71
    %s88 = sphi 0, %s72
  $region4: #{tpu_custom_call.1} parent=0 // loop_header_branch
    %10 = sbr.rel (%p8) target = $region8
  $region5: #{tpu_custom_call.1} parent=0 // loop_body
    %s12 = ssub.s32 %s7, 1
    %s13 = ssub.s32 %s7, 2
    %s23 = sadd.s32 1, %s16
    %p24 = scmp.ge.s32.totalorder %s23, 1
    %s25 = scalar_select %p24, 0, %s23
    %s26 = sadd.s32 1, %s15
    %s27 = scalar_select %p24, %s26, %s15
    %p28 = scmp.ge.s32.totalorder %s27, 1
    %s29 = scalar_select %p28, 0, %s27
    %s30 = sadd.s32 1, %s14
    %s31 = scalar_select %p28, %s30, %s14
    %p32 = scmp.ge.s32.totalorder %s31, 2
    %s33 = scalar_select %p32, 0, %s31
    %s34 = sadd.s32 %s15, %s16
    %s35 = sadd.s32 %s29, %s25
    %s36 = ssub.s32 %s14, %s33
    %s37 = ssub.s32 %s34, %s35
    %s38 = sor.u32 %s36, %s37
    %p39 = scmp.eq.s32.totalorder %s38, 0
    %s41 = sadd.s32 %s40, 1
    %s42 = scalar_select %p39, %s40, %s41
    %p45 = pneg %p39
    %p46 = scmp.eq.s32.totalorder %s7, 1
    %p47 = por %p45, %p46
    %p48 = scmp.ne.s32.totalorder %s40, %s43
    %p49 = scmp.eq.s32.totalorder %s7, 0
    %p50 = por %p48, %p49
    %p51 = scmp.ne.s32.totalorder %s40, %s43
    %p52 = scmp.eq.s32.totalorder %s12, 1
    %p53 = por %p51, %p52
    %p54 = scmp.ne.s32.totalorder %s43, %s44
    %p55 = scmp.eq.s32.totalorder %s12, 0
    %p56 = por %p54, %p55
    %p57 = scmp.ne.s32.totalorder %s43, %s44
    %p58 = scmp.eq.s32.totalorder %s13, 1
    %p59 = por %p57, %p58
    %p61 = scmp.ne.s32.totalorder %s44, %s60
    %p62 = scmp.eq.s32.totalorder %s13, 0
    %p63 = por %p61, %p62
    %s64 = ssub.s32 %s14, %s33
    %s65 = ssub.s32 %s15, %s29
    %s66 = sor.u32 %s64, %s65
    %p67 = scmp.eq.s32.totalorder %s66, 0
    %s69 = sadd.s32 %s68, 1
    %s70 = scalar_select %p67, %s68, %s69
    %p73 = pneg %p67
    %p74 = scmp.eq.s32.totalorder %s7, 1
    %p75 = por %p73, %p74
    %p76 = scmp.ne.s32.totalorder %s68, %s71
    %p77 = scmp.eq.s32.totalorder %s7, 0
    %p78 = por %p76, %p77
    %p79 = scmp.ne.s32.totalorder %s68, %s71
    %p80 = scmp.eq.s32.totalorder %s12, 1
    %p81 = por %p79, %p80
    %p82 = scmp.ne.s32.totalorder %s71, %s72
    %p83 = scmp.eq.s32.totalorder %s12, 0
    %p84 = por %p82, %p83
    %p85 = scmp.ne.s32.totalorder %s71, %s72
    %p86 = scmp.eq.s32.totalorder %s13, 1
    %p87 = por %p85, %p86
    %p89 = scmp.ne.s32.totalorder %s72, %s88
    %p90 = scmp.eq.s32.totalorder %s13, 0
    %p91 = por %p89, %p90
    %p92 = scmp.le.s32.totalorder 1, %s7
    %p93 = scmp.lt.s32.totalorder %s7, 3
    %p94 = pnand %p92, %p93
    %p95 = pneg %p94
    // Predicated region
    $region9: #{tpu_custom_call.1} parent=5 // pred_check
      _
    $region10: #{tpu_custom_call.1} parent=5 // pred_check_branch
      %97 = sbr.rel (%p94) target = $region12
    $region11: #{tpu_custom_call.1} parent=5 // pred_region
      %s98 = ssub.s32 %s7, 1
    $region12: #{tpu_custom_call.1} parent=5 // pred_fallthru
      _
    %p99 = scmp.lt.s32.totalorder %s7, 2
    // Predicated region
    $region13: #{tpu_custom_call.1} parent=5 // pred_check
      %p100 = pneg %p99
    $region14: #{tpu_custom_call.1} parent=5 // pred_check_branch
      %102 = sbr.rel (%p100) target = $region16
    $region15: #{tpu_custom_call.1} parent=5 // pred_region
      // Predicated region
      $region17: #{tpu_custom_call.1} parent=15 // pred_check
        %p103 = pneg %p50
      $region18: #{tpu_custom_call.1} parent=15 // pred_check_branch
        %105 = sbr.rel (%p103) target = $region20
      $region19: #{tpu_custom_call.1} parent=15 // pred_region
        %s106 = sadd.s32 %s15, %s16
        %p107 = scmp.lt.s32.totalorder %s14, 1
        %s108 = scalar_select %p107, %s14, 1
        %p109 = scmp.lt.s32.totalorder %s106, 0
        %s110 = scalar_select %p109, %s106, 0
        %s111 = smul.addr %s108, 64
        %s112 = sadd.s32 %s110, %s111
        %s113 = smul.addr %s112, 8
        %s114 = scalar_lea.vmem %s0, %s113
        %s115 = sadd.s32 %s15, %s16
      $region20: #{tpu_custom_call.1} parent=15 // pred_fallthru
        _
    $region16: #{tpu_custom_call.1} parent=5 // pred_fallthru
      _
    %p116 = scmp.le.s32.totalorder 1, %s7
    %p117 = scmp.lt.s32.totalorder %s7, 3
    %p118 = pnand %p116, %p117
    %p119 = pneg %p118
    // Predicated region
    $region21: #{tpu_custom_call.1} parent=5 // pred_check
      _
    $region22: #{tpu_custom_call.1} parent=5 // pred_check_branch
      %121 = sbr.rel (%p118) target = $region24
    $region23: #{tpu_custom_call.1} parent=5 // pred_region
      %s122 = ssub.s32 %s7, 1
      %s123 = sadd.s32 %s18, %s19
      %p124 = scmp.lt.s32.totalorder %s17, 1
      %s125 = scalar_select %p124, %s17, 1
      %p126 = scmp.lt.s32.totalorder %s123, 0
      %s127 = scalar_select %p126, %s123, 0
      %s128 = smul.addr %s125, 64
      %s129 = sadd.s32 %s127, %s128
      %s130 = smul.addr %s129, 8
      %s131 = scalar_lea.vmem %s0, %s130
      %p132 = pneg %p56
      %p133 = pneg %p53
      %p134 = pneg %p84
      %p135 = pneg %p81
      %p136 = scmp.lt.s32.totalorder %s17, 1
      %s137 = scalar_select %p136, %s17, 1
      %p138 = scmp.lt.s32.totalorder %s18, 0
      %s139 = scalar_select %p138, %s18, 0
      %s140 = smul.addr %s139, 64
      %s141 = smul.addr %s137, 64
      %s142 = sadd.s32 %s140, %s141
      %s143 = smul.addr %s142, 8
      %s144 = scalar_lea.vmem %s1, %s143
      %s145 = sadd.s32 %s18, %s19
      %p146 = scmp.lt.s32.totalorder %s17, 1
      %s147 = scalar_select %p146, %s17, 1
      %p148 = scmp.lt.s32.totalorder %s145, 0
      %s149 = scalar_select %p148, %s145, 0
      %s150 = smul.addr %s147, 64
      %s151 = sadd.s32 %s149, %s150
      %s152 = smul.addr %s151, 8
      %s153 = scalar_lea.vmem %s0, %s152
      %s154 = sadd.s32 %s18, %s19
      %p155 = scmp.lt.s32.totalorder %s17, 1
      %s156 = scalar_select %p155, %s17, 1
      %p157 = scmp.lt.s32.totalorder %s18, 0
      %s158 = scalar_select %p157, %s18, 0
      %s159 = smul.addr %s158, 64
      %s160 = smul.addr %s156, 64
      %s161 = sadd.s32 %s159, %s160
      %s162 = smul.addr %s161, 8
      %s163 = scalar_lea.vmem %s1, %s162
      %p164 = scmp.eq.s32.totalorder %s19, 0
      // Predicated region
      $region25: #{tpu_custom_call.1} parent=23 // pred_check
        %p165 = pneg %p164
      $region26: #{tpu_custom_call.1} parent=23 // pred_check_branch
        %167 = sbr.rel (%p165) target = $region28
      $region27: #{tpu_custom_call.1} parent=23 // pred_region
        %vm168 = vcmask 7168
        %169 = vst.msk [vmem:[#allocation2] sm:$0xff] %vm168, 0.0
        %170 = vst.msk [vmem:[#allocation2 + $0x8] sm:$0xff] %vm168, 0.0
        %171 = vst.msk [vmem:[#allocation2 + $0x10] sm:$0xff] %vm168, 0.0
        %172 = vst.msk [vmem:[#allocation2 + $0x18] sm:$0xff] %vm168, 0.0
        %173 = vst.msk [vmem:[#allocation2 + $0x20] sm:$0xff] %vm168, 0.0
        %174 = vst.msk [vmem:[#allocation2 + $0x28] sm:$0xff] %vm168, 0.0
        %175 = vst.msk [vmem:[#allocation2 + $0x30] sm:$0xff] %vm168, 0.0
        %176 = vst.msk [vmem:[#allocation2 + $0x38] sm:$0xff] %vm168, 0.0
        %177 = vst.msk [vmem:[#allocation2 + $0x40] sm:$0xff] %vm168, 0.0
        %178 = vst.msk [vmem:[#allocation2 + $0x48] sm:$0xff] %vm168, 0.0
        %179 = vst.msk [vmem:[#allocation2 + $0x50] sm:$0xff] %vm168, 0.0
        %180 = vst.msk [vmem:[#allocation2 + $0x58] sm:$0xff] %vm168, 0.0
        %181 = vst.msk [vmem:[#allocation2 + $0x60] sm:$0xff] %vm168, 0.0
        %182 = vst.msk [vmem:[#allocation2 + $0x68] sm:$0xff] %vm168, 0.0
        %183 = vst.msk [vmem:[#allocation2 + $0x70] sm:$0xff] %vm168, 0.0
        %184 = vst.msk [vmem:[#allocation2 + $0x78] sm:$0xff] %vm168, 0.0
        %185 = vst.msk [vmem:[#allocation2 + $0x80] sm:$0xff] %vm168, 0.0
        %186 = vst.msk [vmem:[#allocation2 + $0x88] sm:$0xff] %vm168, 0.0
        %187 = vst.msk [vmem:[#allocation2 + $0x90] sm:$0xff] %vm168, 0.0
        %188 = vst.msk [vmem:[#allocation2 + $0x98] sm:$0xff] %vm168, 0.0
        %189 = vst.msk [vmem:[#allocation2 + $0xa0] sm:$0xff] %vm168, 0.0
        %190 = vst.msk [vmem:[#allocation2 + $0xa8] sm:$0xff] %vm168, 0.0
        %191 = vst.msk [vmem:[#allocation2 + $0xb0] sm:$0xff] %vm168, 0.0
        %192 = vst.msk [vmem:[#allocation2 + $0xb8] sm:$0xff] %vm168, 0.0
        %193 = vst.msk [vmem:[#allocation2 + $0xc0] sm:$0xff] %vm168, 0.0
        %194 = vst.msk [vmem:[#allocation2 + $0xc8] sm:$0xff] %vm168, 0.0
        %195 = vst.msk [vmem:[#allocation2 + $0xd0] sm:$0xff] %vm168, 0.0
        %196 = vst.msk [vmem:[#allocation2 + $0xd8] sm:$0xff] %vm168, 0.0
        %197 = vst.msk [vmem:[#allocation2 + $0xe0] sm:$0xff] %vm168, 0.0
        %198 = vst.msk [vmem:[#allocation2 + $0xe8] sm:$0xff] %vm168, 0.0
        %199 = vst.msk [vmem:[#allocation2 + $0xf0] sm:$0xff] %vm168, 0.0
        %200 = vst.msk [vmem:[#allocation2 + $0xf8] sm:$0xff] %vm168, 0.0
        %201 = vst.msk [vmem:[#allocation2 + $0x100] sm:$0xff] %vm168, 0.0
        %202 = vst.msk [vmem:[#allocation2 + $0x108] sm:$0xff] %vm168, 0.0
        %203 = vst.msk [vmem:[#allocation2 + $0x110] sm:$0xff] %vm168, 0.0
        %204 = vst.msk [vmem:[#allocation2 + $0x118] sm:$0xff] %vm168, 0.0
        %205 = vst.msk [vmem:[#allocation2 + $0x120] sm:$0xff] %vm168, 0.0
        %206 = vst.msk [vmem:[#allocation2 + $0x128] sm:$0xff] %vm168, 0.0
        %207 = vst.msk [vmem:[#allocation2 + $0x130] sm:$0xff] %vm168, 0.0
        %208 = vst.msk [vmem:[#allocation2 + $0x138] sm:$0xff] %vm168, 0.0
        %209 = vst.msk [vmem:[#allocation2 + $0x140] sm:$0xff] %vm168, 0.0
        %210 = vst.msk [vmem:[#allocation2 + $0x148] sm:$0xff] %vm168, 0.0
        %211 = vst.msk [vmem:[#allocation2 + $0x150] sm:$0xff] %vm168, 0.0
        %212 = vst.msk [vmem:[#allocation2 + $0x158] sm:$0xff] %vm168, 0.0
        %213 = vst.msk [vmem:[#allocation2 + $0x160] sm:$0xff] %vm168, 0.0
        %214 = vst.msk [vmem:[#allocation2 + $0x168] sm:$0xff] %vm168, 0.0
        %215 = vst.msk [vmem:[#allocation2 + $0x170] sm:$0xff] %vm168, 0.0
        %216 = vst.msk [vmem:[#allocation2 + $0x178] sm:$0xff] %vm168, 0.0
        %217 = vst.msk [vmem:[#allocation2 + $0x180] sm:$0xff] %vm168, 0.0
        %218 = vst.msk [vmem:[#allocation2 + $0x188] sm:$0xff] %vm168, 0.0
        %219 = vst.msk [vmem:[#allocation2 + $0x190] sm:$0xff] %vm168, 0.0
        %220 = vst.msk [vmem:[#allocation2 + $0x198] sm:$0xff] %vm168, 0.0
        %221 = vst.msk [vmem:[#allocation2 + $0x1a0] sm:$0xff] %vm168, 0.0
        %222 = vst.msk [vmem:[#allocation2 + $0x1a8] sm:$0xff] %vm168, 0.0
        %223 = vst.msk [vmem:[#allocation2 + $0x1b0] sm:$0xff] %vm168, 0.0
        %224 = vst.msk [vmem:[#allocation2 + $0x1b8] sm:$0xff] %vm168, 0.0
        %225 = vst.msk [vmem:[#allocation2 + $0x1c0] sm:$0xff] %vm168, 0.0
        %226 = vst.msk [vmem:[#allocation2 + $0x1c8] sm:$0xff] %vm168, 0.0
        %227 = vst.msk [vmem:[#allocation2 + $0x1d0] sm:$0xff] %vm168, 0.0
        %228 = vst.msk [vmem:[#allocation2 + $0x1d8] sm:$0xff] %vm168, 0.0
        %229 = vst.msk [vmem:[#allocation2 + $0x1e0] sm:$0xff] %vm168, 0.0
        %230 = vst.msk [vmem:[#allocation2 + $0x1e8] sm:$0xff] %vm168, 0.0
        %231 = vst.msk [vmem:[#allocation2 + $0x1f0] sm:$0xff] %vm168, 0.0
        %232 = vst.msk [vmem:[#allocation2 + $0x1f8] sm:$0xff] %vm168, 0.0
        %233 = vst.msk [vmem:[#allocation3] sm:$0xff] %vm168, -inf
        %234 = vst.msk [vmem:[#allocation3 + $0x8] sm:$0xff] %vm168, -inf
        %235 = vst.msk [vmem:[#allocation3 + $0x10] sm:$0xff] %vm168, -inf
        %236 = vst.msk [vmem:[#allocation3 + $0x18] sm:$0xff] %vm168, -inf
        %237 = vst.msk [vmem:[#allocation3 + $0x20] sm:$0xff] %vm168, -inf
        %238 = vst.msk [vmem:[#allocation3 + $0x28] sm:$0xff] %vm168, -inf
        %239 = vst.msk [vmem:[#allocation3 + $0x30] sm:$0xff] %vm168, -inf
        %240 = vst.msk [vmem:[#allocation3 + $0x38] sm:$0xff] %vm168, -inf
        %241 = vst.msk [vmem:[#allocation3 + $0x40] sm:$0xff] %vm168, -inf
        %242 = vst.msk [vmem:[#allocation3 + $0x48] sm:$0xff] %vm168, -inf
        %243 = vst.msk [vmem:[#allocation3 + $0x50] sm:$0xff] %vm168, -inf
        %244 = vst.msk [vmem:[#allocation3 + $0x58] sm:$0xff] %vm168, -inf
        %245 = vst.msk [vmem:[#allocation3 + $0x60] sm:$0xff] %vm168, -inf
        %246 = vst.msk [vmem:[#allocation3 + $0x68] sm:$0xff] %vm168, -inf
        %247 = vst.msk [vmem:[#allocation3 + $0x70] sm:$0xff] %vm168, -inf
        %248 = vst.msk [vmem:[#allocation3 + $0x78] sm:$0xff] %vm168, -inf
        %249 = vst.msk [vmem:[#allocation3 + $0x80] sm:$0xff] %vm168, -inf
        %250 = vst.msk [vmem:[#allocation3 + $0x88] sm:$0xff] %vm168, -inf
        %251 = vst.msk [vmem:[#allocation3 + $0x90] sm:$0xff] %vm168, -inf
        %252 = vst.msk [vmem:[#allocation3 + $0x98] sm:$0xff] %vm168, -inf
        %253 = vst.msk [vmem:[#allocation3 + $0xa0] sm:$0xff] %vm168, -inf
        %254 = vst.msk [vmem:[#allocation3 + $0xa8] sm:$0xff] %vm168, -inf
        %255 = vst.msk [vmem:[#allocation3 + $0xb0] sm:$0xff] %vm168, -inf
        %256 = vst.msk [vmem:[#allocation3 + $0xb8] sm:$0xff] %vm168, -inf
        %257 = vst.msk [vmem:[#allocation3 + $0xc0] sm:$0xff] %vm168, -inf
        %258 = vst.msk [vmem:[#allocation3 + $0xc8] sm:$0xff] %vm168, -inf
        %259 = vst.msk [vmem:[#allocation3 + $0xd0] sm:$0xff] %vm168, -inf
        %260 = vst.msk [vmem:[#allocation3 + $0xd8] sm:$0xff] %vm168, -inf
        %261 = vst.msk [vmem:[#allocation3 + $0xe0] sm:$0xff] %vm168, -inf
        %262 = vst.msk [vmem:[#allocation3 + $0xe8] sm:$0xff] %vm168, -inf
        %263 = vst.msk [vmem:[#allocation3 + $0xf0] sm:$0xff] %vm168, -inf
        %264 = vst.msk [vmem:[#allocation3 + $0xf8] sm:$0xff] %vm168, -inf
        %265 = vst.msk [vmem:[#allocation3 + $0x100] sm:$0xff] %vm168, -inf
        %266 = vst.msk [vmem:[#allocation3 + $0x108] sm:$0xff] %vm168, -inf
        %267 = vst.msk [vmem:[#allocation3 + $0x110] sm:$0xff] %vm168, -inf
        %268 = vst.msk [vmem:[#allocation3 + $0x118] sm:$0xff] %vm168, -inf
        %269 = vst.msk [vmem:[#allocation3 + $0x120] sm:$0xff] %vm168, -inf
        %270 = vst.msk [vmem:[#allocation3 + $0x128] sm:$0xff] %vm168, -inf
        %271 = vst.msk [vmem:[#allocation3 + $0x130] sm:$0xff] %vm168, -inf
        %272 = vst.msk [vmem:[#allocation3 + $0x138] sm:$0xff] %vm168, -inf
        %273 = vst.msk [vmem:[#allocation3 + $0x140] sm:$0xff] %vm168, -inf
        %274 = vst.msk [vmem:[#allocation3 + $0x148] sm:$0xff] %vm168, -inf
        %275 = vst.msk [vmem:[#allocation3 + $0x150] sm:$0xff] %vm168, -inf
        %276 = vst.msk [vmem:[#allocation3 + $0x158] sm:$0xff] %vm168, -inf
        %277 = vst.msk [vmem:[#allocation3 + $0x160] sm:$0xff] %vm168, -inf
        %278 = vst.msk [vmem:[#allocation3 + $0x168] sm:$0xff] %vm168, -inf
        %279 = vst.msk [vmem:[#allocation3 + $0x170] sm:$0xff] %vm168, -inf
        %280 = vst.msk [vmem:[#allocation3 + $0x178] sm:$0xff] %vm168, -inf
        %281 = vst.msk [vmem:[#allocation3 + $0x180] sm:$0xff] %vm168, -inf
        %282 = vst.msk [vmem:[#allocation3 + $0x188] sm:$0xff] %vm168, -inf
        %283 = vst.msk [vmem:[#allocation3 + $0x190] sm:$0xff] %vm168, -inf
        %284 = vst.msk [vmem:[#allocation3 + $0x198] sm:$0xff] %vm168, -inf
        %285 = vst.msk [vmem:[#allocation3 + $0x1a0] sm:$0xff] %vm168, -inf
        %286 = vst.msk [vmem:[#allocation3 + $0x1a8] sm:$0xff] %vm168, -inf
        %287 = vst.msk [vmem:[#allocation3 + $0x1b0] sm:$0xff] %vm168, -inf
        %288 = vst.msk [vmem:[#allocation3 + $0x1b8] sm:$0xff] %vm168, -inf
        %289 = vst.msk [vmem:[#allocation3 + $0x1c0] sm:$0xff] %vm168, -inf
        %290 = vst.msk [vmem:[#allocation3 + $0x1c8] sm:$0xff] %vm168, -inf
        %291 = vst.msk [vmem:[#allocation3 + $0x1d0] sm:$0xff] %vm168, -inf
        %292 = vst.msk [vmem:[#allocation3 + $0x1d8] sm:$0xff] %vm168, -inf
        %293 = vst.msk [vmem:[#allocation3 + $0x1e0] sm:$0xff] %vm168, -inf
        %294 = vst.msk [vmem:[#allocation3 + $0x1e8] sm:$0xff] %vm168, -inf
        %295 = vst.msk [vmem:[#allocation3 + $0x1f0] sm:$0xff] %vm168, -inf
        %296 = vst.msk [vmem:[#allocation3 + $0x1f8] sm:$0xff] %vm168, -inf
      $region28: #{tpu_custom_call.1} parent=23 // pred_fallthru
        _
      %v297 = vld [vmem:[%s153] sm:$0xff]
      %v298 = vld [vmem:[%s153 + $0x8] sm:$0xff]
      %v299 = vld [vmem:[%s153 + $0x10] sm:$0xff]
      %v300 = vld [vmem:[%s153 + $0x18] sm:$0xff]
      %v301 = vld [vmem:[%s153 + $0x20] sm:$0xff]
      %v302 = vld [vmem:[%s153 + $0x28] sm:$0xff]
      %v303 = vld [vmem:[%s153 + $0x30] sm:$0xff]
      %v304 = vld [vmem:[%s153 + $0x38] sm:$0xff]
      %v305 = vld [vmem:[%s153 + $0x40] sm:$0xff]
      %v306 = vld [vmem:[%s153 + $0x48] sm:$0xff]
      %v307 = vld [vmem:[%s153 + $0x50] sm:$0xff]
      %v308 = vld [vmem:[%s153 + $0x58] sm:$0xff]
      %v309 = vld [vmem:[%s153 + $0x60] sm:$0xff]
      %v310 = vld [vmem:[%s153 + $0x68] sm:$0xff]
      %v311 = vld [vmem:[%s153 + $0x70] sm:$0xff]
      %v312 = vld [vmem:[%s153 + $0x78] sm:$0xff]
      %v313 = vld [vmem:[%s153 + $0x80] sm:$0xff]
      %v314 = vld [vmem:[%s153 + $0x88] sm:$0xff]
      %v315 = vld [vmem:[%s153 + $0x90] sm:$0xff]
      %v316 = vld [vmem:[%s153 + $0x98] sm:$0xff]
      %v317 = vld [vmem:[%s153 + $0xa0] sm:$0xff]
      %v318 = vld [vmem:[%s153 + $0xa8] sm:$0xff]
      %v319 = vld [vmem:[%s153 + $0xb0] sm:$0xff]
      %v320 = vld [vmem:[%s153 + $0xb8] sm:$0xff]
      %v321 = vld [vmem:[%s153 + $0xc0] sm:$0xff]
      %v322 = vld [vmem:[%s153 + $0xc8] sm:$0xff]
      %v323 = vld [vmem:[%s153 + $0xd0] sm:$0xff]
      %v324 = vld [vmem:[%s153 + $0xd8] sm:$0xff]
      %v325 = vld [vmem:[%s153 + $0xe0] sm:$0xff]
      %v326 = vld [vmem:[%s153 + $0xe8] sm:$0xff]
      %v327 = vld [vmem:[%s153 + $0xf0] sm:$0xff]
      %v328 = vld [vmem:[%s153 + $0xf8] sm:$0xff]
      %v329 = vld [vmem:[%s153 + $0x100] sm:$0xff]
      %v330 = vld [vmem:[%s153 + $0x108] sm:$0xff]
      %v331 = vld [vmem:[%s153 + $0x110] sm:$0xff]
      %v332 = vld [vmem:[%s153 + $0x118] sm:$0xff]
      %v333 = vld [vmem:[%s153 + $0x120] sm:$0xff]
      %v334 = vld [vmem:[%s153 + $0x128] sm:$0xff]
      %v335 = vld [vmem:[%s153 + $0x130] sm:$0xff]
      %v336 = vld [vmem:[%s153 + $0x138] sm:$0xff]
      %v337 = vld [vmem:[%s153 + $0x140] sm:$0xff]
      %v338 = vld [vmem:[%s153 + $0x148] sm:$0xff]
      %v339 = vld [vmem:[%s153 + $0x150] sm:$0xff]
      %v340 = vld [vmem:[%s153 + $0x158] sm:$0xff]
      %v341 = vld [vmem:[%s153 + $0x160] sm:$0xff]
      %v342 = vld [vmem:[%s153 + $0x168] sm:$0xff]
      %v343 = vld [vmem:[%s153 + $0x170] sm:$0xff]
      %v344 = vld [vmem:[%s153 + $0x178] sm:$0xff]
      %v345 = vld [vmem:[%s153 + $0x180] sm:$0xff]
      %v346 = vld [vmem:[%s153 + $0x188] sm:$0xff]
      %v347 = vld [vmem:[%s153 + $0x190] sm:$0xff]
      %v348 = vld [vmem:[%s153 + $0x198] sm:$0xff]
      %v349 = vld [vmem:[%s153 + $0x1a0] sm:$0xff]
      %v350 = vld [vmem:[%s153 + $0x1a8] sm:$0xff]
      %v351 = vld [vmem:[%s153 + $0x1b0] sm:$0xff]
      %v352 = vld [vmem:[%s153 + $0x1b8] sm:$0xff]
      %v353 = vld [vmem:[%s153 + $0x1c0] sm:$0xff]
      %v354 = vld [vmem:[%s153 + $0x1c8] sm:$0xff]
      %v355 = vld [vmem:[%s153 + $0x1d0] sm:$0xff]
      %v356 = vld [vmem:[%s153 + $0x1d8] sm:$0xff]
      %v357 = vld [vmem:[%s153 + $0x1e0] sm:$0xff]
      %v358 = vld [vmem:[%s153 + $0x1e8] sm:$0xff]
      %v359 = vld [vmem:[%s153 + $0x1f0] sm:$0xff]
      %v360 = vld [vmem:[%s153 + $0x1f8] sm:$0xff]
      %v361 = vld [vmem:[#allocation2] sm:$0xff]
      %v362 = vld [vmem:[#allocation2 + $0x8] sm:$0xff]
      %v363 = vld [vmem:[#allocation2 + $0x10] sm:$0xff]
      %v364 = vld [vmem:[#allocation2 + $0x18] sm:$0xff]
      %v365 = vld [vmem:[#allocation2 + $0x20] sm:$0xff]
      %v366 = vld [vmem:[#allocation2 + $0x28] sm:$0xff]
      %v367 = vld [vmem:[#allocation2 + $0x30] sm:$0xff]
      %v368 = vld [vmem:[#allocation2 + $0x38] sm:$0xff]
      %v369 = vld [vmem:[#allocation2 + $0x40] sm:$0xff]
      %v370 = vld [vmem:[#allocation2 + $0x48] sm:$0xff]
      %v371 = vld [vmem:[#allocation2 + $0x50] sm:$0xff]
      %v372 = vld [vmem:[#allocation2 + $0x58] sm:$0xff]
      %v373 = vld [vmem:[#allocation2 + $0x60] sm:$0xff]
      %v374 = vld [vmem:[#allocation2 + $0x68] sm:$0xff]
      %v375 = vld [vmem:[#allocation2 + $0x70] sm:$0xff]
      %v376 = vld [vmem:[#allocation2 + $0x78] sm:$0xff]
      %v377 = vld [vmem:[#allocation2 + $0x80] sm:$0xff]
      %v378 = vld [vmem:[#allocation2 + $0x88] sm:$0xff]
      %v379 = vld [vmem:[#allocation2 + $0x90] sm:$0xff]
      %v380 = vld [vmem:[#allocation2 + $0x98] sm:$0xff]
      %v381 = vld [vmem:[#allocation2 + $0xa0] sm:$0xff]
      %v382 = vld [vmem:[#allocation2 + $0xa8] sm:$0xff]
      %v383 = vld [vmem:[#allocation2 + $0xb0] sm:$0xff]
      %v384 = vld [vmem:[#allocation2 + $0xb8] sm:$0xff]
      %v385 = vld [vmem:[#allocation2 + $0xc0] sm:$0xff]
      %v386 = vld [vmem:[#allocation2 + $0xc8] sm:$0xff]
      %v387 = vld [vmem:[#allocation2 + $0xd0] sm:$0xff]
      %v388 = vld [vmem:[#allocation2 + $0xd8] sm:$0xff]
      %v389 = vld [vmem:[#allocation2 + $0xe0] sm:$0xff]
      %v390 = vld [vmem:[#allocation2 + $0xe8] sm:$0xff]
      %v391 = vld [vmem:[#allocation2 + $0xf0] sm:$0xff]
      %v392 = vld [vmem:[#allocation2 + $0xf8] sm:$0xff]
      %v393 = vld [vmem:[#allocation2 + $0x100] sm:$0xff]
      %v394 = vld [vmem:[#allocation2 + $0x108] sm:$0xff]
      %v395 = vld [vmem:[#allocation2 + $0x110] sm:$0xff]
      %v396 = vld [vmem:[#allocation2 + $0x118] sm:$0xff]
      %v397 = vld [vmem:[#allocation2 + $0x120] sm:$0xff]
      %v398 = vld [vmem:[#allocation2 + $0x128] sm:$0xff]
      %v399 = vld [vmem:[#allocation2 + $0x130] sm:$0xff]
      %v400 = vld [vmem:[#allocation2 + $0x138] sm:$0xff]
      %v401 = vld [vmem:[#allocation2 + $0x140] sm:$0xff]
      %v402 = vld [vmem:[#allocation2 + $0x148] sm:$0xff]
      %v403 = vld [vmem:[#allocation2 + $0x150] sm:$0xff]
      %v404 = vld [vmem:[#allocation2 + $0x158] sm:$0xff]
      %v405 = vld [vmem:[#allocation2 + $0x160] sm:$0xff]
      %v406 = vld [vmem:[#allocation2 + $0x168] sm:$0xff]
      %v407 = vld [vmem:[#allocation2 + $0x170] sm:$0xff]
      %v408 = vld [vmem:[#allocation2 + $0x178] sm:$0xff]
      %v409 = vld [vmem:[#allocation2 + $0x180] sm:$0xff]
      %v410 = vld [vmem:[#allocation2 + $0x188] sm:$0xff]
      %v411 = vld [vmem:[#allocation2 + $0x190] sm:$0xff]
      %v412 = vld [vmem:[#allocation2 + $0x198] sm:$0xff]
      %v413 = vld [vmem:[#allocation2 + $0x1a0] sm:$0xff]
      %v414 = vld [vmem:[#allocation2 + $0x1a8] sm:$0xff]
      %v415 = vld [vmem:[#allocation2 + $0x1b0] sm:$0xff]
      %v416 = vld [vmem:[#allocation2 + $0x1b8] sm:$0xff]
      %v417 = vld [vmem:[#allocation2 + $0x1c0] sm:$0xff]
      %v418 = vld [vmem:[#allocation2 + $0x1c8] sm:$0xff]
      %v419 = vld [vmem:[#allocation2 + $0x1d0] sm:$0xff]
      %v420 = vld [vmem:[#allocation2 + $0x1d8] sm:$0xff]
      %v421 = vld [vmem:[#allocation2 + $0x1e0] sm:$0xff]
      %v422 = vld [vmem:[#allocation2 + $0x1e8] sm:$0xff]
      %v423 = vld [vmem:[#allocation2 + $0x1f0] sm:$0xff]
      %v424 = vld [vmem:[#allocation2 + $0x1f8] sm:$0xff]
      %vm425 = vcmask 523264
      %v426 = vsel %vm425, %v297, 0.0
      %427 = vadd.xlane.f32.xlu0 %v426
      %v428 = vpop.xlane.xlu0 %427
      %v429 = vsel %vm425, %v298, 0.0
      %430 = vadd.xlane.f32.xlu0 %v429
      %v431 = vpop.xlane.xlu0 %430
      %v432 = vsel %vm425, %v299, 0.0
      %433 = vadd.xlane.f32.xlu0 %v432
      %v434 = vpop.xlane.xlu0 %433
      %v435 = vsel %vm425, %v300, 0.0
      %436 = vadd.xlane.f32.xlu0 %v435
      %v437 = vpop.xlane.xlu0 %436
      %v438 = vsel %vm425, %v301, 0.0
      %439 = vadd.xlane.f32.xlu0 %v438
      %v440 = vpop.xlane.xlu0 %439
      %v441 = vsel %vm425, %v302, 0.0
      %442 = vadd.xlane.f32.xlu0 %v441
      %v443 = vpop.xlane.xlu0 %442
      %v444 = vsel %vm425, %v303, 0.0
      %445 = vadd.xlane.f32.xlu0 %v444
      %v446 = vpop.xlane.xlu0 %445
      %v447 = vsel %vm425, %v304, 0.0
      %448 = vadd.xlane.f32.xlu0 %v447
      %v449 = vpop.xlane.xlu0 %448
      %v450 = vsel %vm425, %v305, 0.0
      %451 = vadd.xlane.f32.xlu0 %v450
      %v452 = vpop.xlane.xlu0 %451
      %v453 = vsel %vm425, %v306, 0.0
      %454 = vadd.xlane.f32.xlu0 %v453
      %v455 = vpop.xlane.xlu0 %454
      %v456 = vsel %vm425, %v307, 0.0
      %457 = vadd.xlane.f32.xlu0 %v456
      %v458 = vpop.xlane.xlu0 %457
      %v459 = vsel %vm425, %v308, 0.0
      %460 = vadd.xlane.f32.xlu0 %v459
      %v461 = vpop.xlane.xlu0 %460
      %v462 = vsel %vm425, %v309, 0.0
      %463 = vadd.xlane.f32.xlu0 %v462
      %v464 = vpop.xlane.xlu0 %463
      %v465 = vsel %vm425, %v310, 0.0
      %466 = vadd.xlane.f32.xlu0 %v465
      %v467 = vpop.xlane.xlu0 %466
      %v468 = vsel %vm425, %v311, 0.0
      %469 = vadd.xlane.f32.xlu0 %v468
      %v470 = vpop.xlane.xlu0 %469
      %v471 = vsel %vm425, %v312, 0.0
      %472 = vadd.xlane.f32.xlu0 %v471
      %v473 = vpop.xlane.xlu0 %472
      %v474 = vsel %vm425, %v313, 0.0
      %475 = vadd.xlane.f32.xlu0 %v474
      %v476 = vpop.xlane.xlu0 %475
      %v477 = vsel %vm425, %v314, 0.0
      %478 = vadd.xlane.f32.xlu0 %v477
      %v479 = vpop.xlane.xlu0 %478
      %v480 = vsel %vm425, %v315, 0.0
      %481 = vadd.xlane.f32.xlu0 %v480
      %v482 = vpop.xlane.xlu0 %481
      %v483 = vsel %vm425, %v316, 0.0
      %484 = vadd.xlane.f32.xlu0 %v483
      %v485 = vpop.xlane.xlu0 %484
      %v486 = vsel %vm425, %v317, 0.0
      %487 = vadd.xlane.f32.xlu0 %v486
      %v488 = vpop.xlane.xlu0 %487
      %v489 = vsel %vm425, %v318, 0.0
      %490 = vadd.xlane.f32.xlu0 %v489
      %v491 = vpop.xlane.xlu0 %490
      %v492 = vsel %vm425, %v319, 0.0
      %493 = vadd.xlane.f32.xlu0 %v492
      %v494 = vpop.xlane.xlu0 %493
      %v495 = vsel %vm425, %v320, 0.0
      %496 = vadd.xlane.f32.xlu0 %v495
      %v497 = vpop.xlane.xlu0 %496
      %v498 = vsel %vm425, %v321, 0.0
      %499 = vadd.xlane.f32.xlu0 %v498
      %v500 = vpop.xlane.xlu0 %499
      %v501 = vsel %vm425, %v322, 0.0
      %502 = vadd.xlane.f32.xlu0 %v501
      %v503 = vpop.xlane.xlu0 %502
      %v504 = vsel %vm425, %v323, 0.0
      %505 = vadd.xlane.f32.xlu0 %v504
      %v506 = vpop.xlane.xlu0 %505
      %v507 = vsel %vm425, %v324, 0.0
      %508 = vadd.xlane.f32.xlu0 %v507
      %v509 = vpop.xlane.xlu0 %508
      %v510 = vsel %vm425, %v325, 0.0
      %511 = vadd.xlane.f32.xlu0 %v510
      %v512 = vpop.xlane.xlu0 %511
      %v513 = vsel %vm425, %v326, 0.0
      %514 = vadd.xlane.f32.xlu0 %v513
      %v515 = vpop.xlane.xlu0 %514
      %v516 = vsel %vm425, %v327, 0.0
      %517 = vadd.xlane.f32.xlu0 %v516
      %v518 = vpop.xlane.xlu0 %517
      %v519 = vsel %vm425, %v328, 0.0
      %520 = vadd.xlane.f32.xlu0 %v519
      %v521 = vpop.xlane.xlu0 %520
      %v522 = vsel %vm425, %v329, 0.0
      %523 = vadd.xlane.f32.xlu0 %v522
      %v524 = vpop.xlane.xlu0 %523
      %v525 = vsel %vm425, %v330, 0.0
      %526 = vadd.xlane.f32.xlu0 %v525
      %v527 = vpop.xlane.xlu0 %526
      %v528 = vsel %vm425, %v331, 0.0
      %529 = vadd.xlane.f32.xlu0 %v528
      %v530 = vpop.xlane.xlu0 %529
      %v531 = vsel %vm425, %v332, 0.0
      %532 = vadd.xlane.f32.xlu0 %v531
      %v533 = vpop.xlane.xlu0 %532
      %v534 = vsel %vm425, %v333, 0.0
      %535 = vadd.xlane.f32.xlu0 %v534
      %v536 = vpop.xlane.xlu0 %535
      %v537 = vsel %vm425, %v334, 0.0
      %538 = vadd.xlane.f32.xlu0 %v537
      %v539 = vpop.xlane.xlu0 %538
      %v540 = vsel %vm425, %v335, 0.0
      %541 = vadd.xlane.f32.xlu0 %v540
      %v542 = vpop.xlane.xlu0 %541
      %v543 = vsel %vm425, %v336, 0.0
      %544 = vadd.xlane.f32.xlu0 %v543
      %v545 = vpop.xlane.xlu0 %544
      %v546 = vsel %vm425, %v337, 0.0
      %547 = vadd.xlane.f32.xlu0 %v546
      %v548 = vpop.xlane.xlu0 %547
      %v549 = vsel %vm425, %v338, 0.0
      %550 = vadd.xlane.f32.xlu0 %v549
      %v551 = vpop.xlane.xlu0 %550
      %v552 = vsel %vm425, %v339, 0.0
      %553 = vadd.xlane.f32.xlu0 %v552
      %v554 = vpop.xlane.xlu0 %553
      %v555 = vsel %vm425, %v340, 0.0
      %556 = vadd.xlane.f32.xlu0 %v555
      %v557 = vpop.xlane.xlu0 %556
      %v558 = vsel %vm425, %v341, 0.0
      %559 = vadd.xlane.f32.xlu0 %v558
      %v560 = vpop.xlane.xlu0 %559
      %v561 = vsel %vm425, %v342, 0.0
      %562 = vadd.xlane.f32.xlu0 %v561
      %v563 = vpop.xlane.xlu0 %562
      %v564 = vsel %vm425, %v343, 0.0
      %565 = vadd.xlane.f32.xlu0 %v564
      %v566 = vpop.xlane.xlu0 %565
      %v567 = vsel %vm425, %v344, 0.0
      %568 = vadd.xlane.f32.xlu0 %v567
      %v569 = vpop.xlane.xlu0 %568
      %v570 = vsel %vm425, %v345, 0.0
      %571 = vadd.xlane.f32.xlu0 %v570
      %v572 = vpop.xlane.xlu0 %571
      %v573 = vsel %vm425, %v346, 0.0
      %574 = vadd.xlane.f32.xlu0 %v573
      %v575 = vpop.xlane.xlu0 %574
      %v576 = vsel %vm425, %v347, 0.0
      %577 = vadd.xlane.f32.xlu0 %v576
      %v578 = vpop.xlane.xlu0 %577
      %v579 = vsel %vm425, %v348, 0.0
      %580 = vadd.xlane.f32.xlu0 %v579
      %v581 = vpop.xlane.xlu0 %580
      %v582 = vsel %vm425, %v349, 0.0
      %583 = vadd.xlane.f32.xlu0 %v582
      %v584 = vpop.xlane.xlu0 %583
      %v585 = vsel %vm425, %v350, 0.0
      %586 = vadd.xlane.f32.xlu0 %v585
      %v587 = vpop.xlane.xlu0 %586
      %v588 = vsel %vm425, %v351, 0.0
      %589 = vadd.xlane.f32.xlu0 %v588
      %v590 = vpop.xlane.xlu0 %589
      %v591 = vsel %vm425, %v352, 0.0
      %592 = vadd.xlane.f32.xlu0 %v591
      %v593 = vpop.xlane.xlu0 %592
      %v594 = vsel %vm425, %v353, 0.0
      %595 = vadd.xlane.f32.xlu0 %v594
      %v596 = vpop.xlane.xlu0 %595
      %v597 = vsel %vm425, %v354, 0.0
      %598 = vadd.xlane.f32.xlu0 %v597
      %v599 = vpop.xlane.xlu0 %598
      %v600 = vsel %vm425, %v355, 0.0
      %601 = vadd.xlane.f32.xlu0 %v600
      %v602 = vpop.xlane.xlu0 %601
      %v603 = vsel %vm425, %v356, 0.0
      %604 = vadd.xlane.f32.xlu0 %v603
      %v605 = vpop.xlane.xlu0 %604
      %v606 = vsel %vm425, %v357, 0.0
      %607 = vadd.xlane.f32.xlu0 %v606
      %v608 = vpop.xlane.xlu0 %607
      %v609 = vsel %vm425, %v358, 0.0
      %610 = vadd.xlane.f32.xlu0 %v609
      %v611 = vpop.xlane.xlu0 %610
      %v612 = vsel %vm425, %v359, 0.0
      %613 = vadd.xlane.f32.xlu0 %v612
      %v614 = vpop.xlane.xlu0 %613
      %v615 = vsel %vm425, %v360, 0.0
      %616 = vadd.xlane.f32.xlu0 %v615
      %v617 = vpop.xlane.xlu0 %616
      %v618 = vadd.f32 %v361, %v428
      %v619 = vadd.f32 %v362, %v431
      %v620 = vadd.f32 %v363, %v434
      %v621 = vadd.f32 %v364, %v437
      %v622 = vadd.f32 %v365, %v440
      %v623 = vadd.f32 %v366, %v443
      %v624 = vadd.f32 %v367, %v446
      %v625 = vadd.f32 %v368, %v449
      %v626 = vadd.f32 %v369, %v452
      %v627 = vadd.f32 %v370, %v455
      %v628 = vadd.f32 %v371, %v458
      %v629 = vadd.f32 %v372, %v461
      %v630 = vadd.f32 %v373, %v464
      %v631 = vadd.f32 %v374, %v467
      %v632 = vadd.f32 %v375, %v470
      %v633 = vadd.f32 %v376, %v473
      %v634 = vadd.f32 %v377, %v476
      %v635 = vadd.f32 %v378, %v479
      %v636 = vadd.f32 %v379, %v482
      %v637 = vadd.f32 %v380, %v485
      %v638 = vadd.f32 %v381, %v488
      %v639 = vadd.f32 %v382, %v491
      %v640 = vadd.f32 %v383, %v494
      %v641 = vadd.f32 %v384, %v497
      %v642 = vadd.f32 %v385, %v500
      %v643 = vadd.f32 %v386, %v503
      %v644 = vadd.f32 %v387, %v506
      %v645 = vadd.f32 %v388, %v509
      %v646 = vadd.f32 %v389, %v512
      %v647 = vadd.f32 %v390, %v515
      %v648 = vadd.f32 %v391, %v518
      %v649 = vadd.f32 %v392, %v521
      %v650 = vadd.f32 %v393, %v524
      %v651 = vadd.f32 %v394, %v527
      %v652 = vadd.f32 %v395, %v530
      %v653 = vadd.f32 %v396, %v533
      %v654 = vadd.f32 %v397, %v536
      %v655 = vadd.f32 %v398, %v539
      %v656 = vadd.f32 %v399, %v542
      %v657 = vadd.f32 %v400, %v545
      %v658 = vadd.f32 %v401, %v548
      %v659 = vadd.f32 %v402, %v551
      %v660 = vadd.f32 %v403, %v554
      %v661 = vadd.f32 %v404, %v557
      %v662 = vadd.f32 %v405, %v560
      %v663 = vadd.f32 %v406, %v563
      %v664 = vadd.f32 %v407, %v566
      %v665 = vadd.f32 %v408, %v569
      %v666 = vadd.f32 %v409, %v572
      %v667 = vadd.f32 %v410, %v575
      %v668 = vadd.f32 %v411, %v578
      %v669 = vadd.f32 %v412, %v581
      %v670 = vadd.f32 %v413, %v584
      %v671 = vadd.f32 %v414, %v587
      %v672 = vadd.f32 %v415, %v590
      %v673 = vadd.f32 %v416, %v593
      %v674 = vadd.f32 %v417, %v596
      %v675 = vadd.f32 %v418, %v599
      %v676 = vadd.f32 %v419, %v602
      %v677 = vadd.f32 %v420, %v605
      %v678 = vadd.f32 %v421, %v608
      %v679 = vadd.f32 %v422, %v611
      %v680 = vadd.f32 %v423, %v614
      %v681 = vadd.f32 %v424, %v617
      %vm682 = vcmask 7168
      %683 = vst.msk [vmem:[#allocation2] sm:$0xff] %vm682, %v618
      %684 = vst.msk [vmem:[#allocation2 + $0x8] sm:$0xff] %vm682, %v619
      %685 = vst.msk [vmem:[#allocation2 + $0x10] sm:$0xff] %vm682, %v620
      %686 = vst.msk [vmem:[#allocation2 + $0x18] sm:$0xff] %vm682, %v621
      %687 = vst.msk [vmem:[#allocation2 + $0x20] sm:$0xff] %vm682, %v622
      %688 = vst.msk [vmem:[#allocation2 + $0x28] sm:$0xff] %vm682, %v623
      %689 = vst.msk [vmem:[#allocation2 + $0x30] sm:$0xff] %vm682, %v624
      %690 = vst.msk [vmem:[#allocation2 + $0x38] sm:$0xff] %vm682, %v625
      %691 = vst.msk [vmem:[#allocation2 + $0x40] sm:$0xff] %vm682, %v626
      %692 = vst.msk [vmem:[#allocation2 + $0x48] sm:$0xff] %vm682, %v627
      %693 = vst.msk [vmem:[#allocation2 + $0x50] sm:$0xff] %vm682, %v628
      %694 = vst.msk [vmem:[#allocation2 + $0x58] sm:$0xff] %vm682, %v629
      %695 = vst.msk [vmem:[#allocation2 + $0x60] sm:$0xff] %vm682, %v630
      %696 = vst.msk [vmem:[#allocation2 + $0x68] sm:$0xff] %vm682, %v631
      %697 = vst.msk [vmem:[#allocation2 + $0x70] sm:$0xff] %vm682, %v632
      %698 = vst.msk [vmem:[#allocation2 + $0x78] sm:$0xff] %vm682, %v633
      %699 = vst.msk [vmem:[#allocation2 + $0x80] sm:$0xff] %vm682, %v634
      %700 = vst.msk [vmem:[#allocation2 + $0x88] sm:$0xff] %vm682, %v635
      %701 = vst.msk [vmem:[#allocation2 + $0x90] sm:$0xff] %vm682, %v636
      %702 = vst.msk [vmem:[#allocation2 + $0x98] sm:$0xff] %vm682, %v637
      %703 = vst.msk [vmem:[#allocation2 + $0xa0] sm:$0xff] %vm682, %v638
      %704 = vst.msk [vmem:[#allocation2 + $0xa8] sm:$0xff] %vm682, %v639
      %705 = vst.msk [vmem:[#allocation2 + $0xb0] sm:$0xff] %vm682, %v640
      %706 = vst.msk [vmem:[#allocation2 + $0xb8] sm:$0xff] %vm682, %v641
      %707 = vst.msk [vmem:[#allocation2 + $0xc0] sm:$0xff] %vm682, %v642
      %708 = vst.msk [vmem:[#allocation2 + $0xc8] sm:$0xff] %vm682, %v643
      %709 = vst.msk [vmem:[#allocation2 + $0xd0] sm:$0xff] %vm682, %v644
      %710 = vst.msk [vmem:[#allocation2 + $0xd8] sm:$0xff] %vm682, %v645
      %711 = vst.msk [vmem:[#allocation2 + $0xe0] sm:$0xff] %vm682, %v646
      %712 = vst.msk [vmem:[#allocation2 + $0xe8] sm:$0xff] %vm682, %v647
      %713 = vst.msk [vmem:[#allocation2 + $0xf0] sm:$0xff] %vm682, %v648
      %714 = vst.msk [vmem:[#allocation2 + $0xf8] sm:$0xff] %vm682, %v649
      %715 = vst.msk [vmem:[#allocation2 + $0x100] sm:$0xff] %vm682, %v650
      %716 = vst.msk [vmem:[#allocation2 + $0x108] sm:$0xff] %vm682, %v651
      %717 = vst.msk [vmem:[#allocation2 + $0x110] sm:$0xff] %vm682, %v652
      %718 = vst.msk [vmem:[#allocation2 + $0x118] sm:$0xff] %vm682, %v653
      %719 = vst.msk [vmem:[#allocation2 + $0x120] sm:$0xff] %vm682, %v654
      %720 = vst.msk [vmem:[#allocation2 + $0x128] sm:$0xff] %vm682, %v655
      %721 = vst.msk [vmem:[#allocation2 + $0x130] sm:$0xff] %vm682, %v656
      %722 = vst.msk [vmem:[#allocation2 + $0x138] sm:$0xff] %vm682, %v657
      %723 = vst.msk [vmem:[#allocation2 + $0x140] sm:$0xff] %vm682, %v658
      %724 = vst.msk [vmem:[#allocation2 + $0x148] sm:$0xff] %vm682, %v659
      %725 = vst.msk [vmem:[#allocation2 + $0x150] sm:$0xff] %vm682, %v660
      %726 = vst.msk [vmem:[#allocation2 + $0x158] sm:$0xff] %vm682, %v661
      %727 = vst.msk [vmem:[#allocation2 + $0x160] sm:$0xff] %vm682, %v662
      %728 = vst.msk [vmem:[#allocation2 + $0x168] sm:$0xff] %vm682, %v663
      %729 = vst.msk [vmem:[#allocation2 + $0x170] sm:$0xff] %vm682, %v664
      %730 = vst.msk [vmem:[#allocation2 + $0x178] sm:$0xff] %vm682, %v665
      %731 = vst.msk [vmem:[#allocation2 + $0x180] sm:$0xff] %vm682, %v666
      %732 = vst.msk [vmem:[#allocation2 + $0x188] sm:$0xff] %vm682, %v667
      %733 = vst.msk [vmem:[#allocation2 + $0x190] sm:$0xff] %vm682, %v668
      %734 = vst.msk [vmem:[#allocation2 + $0x198] sm:$0xff] %vm682, %v669
      %735 = vst.msk [vmem:[#allocation2 + $0x1a0] sm:$0xff] %vm682, %v670
      %736 = vst.msk [vmem:[#allocation2 + $0x1a8] sm:$0xff] %vm682, %v671
      %737 = vst.msk [vmem:[#allocation2 + $0x1b0] sm:$0xff] %vm682, %v672
      %738 = vst.msk [vmem:[#allocation2 + $0x1b8] sm:$0xff] %vm682, %v673
      %739 = vst.msk [vmem:[#allocation2 + $0x1c0] sm:$0xff] %vm682, %v674
      %740 = vst.msk [vmem:[#allocation2 + $0x1c8] sm:$0xff] %vm682, %v675
      %741 = vst.msk [vmem:[#allocation2 + $0x1d0] sm:$0xff] %vm682, %v676
      %742 = vst.msk [vmem:[#allocation2 + $0x1d8] sm:$0xff] %vm682, %v677
      %743 = vst.msk [vmem:[#allocation2 + $0x1e0] sm:$0xff] %vm682, %v678
      %744 = vst.msk [vmem:[#allocation2 + $0x1e8] sm:$0xff] %vm682, %v679
      %745 = vst.msk [vmem:[#allocation2 + $0x1f0] sm:$0xff] %vm682, %v680
      %746 = vst.msk [vmem:[#allocation2 + $0x1f8] sm:$0xff] %vm682, %v681
      %v747 = vld [vmem:[#allocation3] sm:$0xff]
      %v748 = vld [vmem:[#allocation3 + $0x8] sm:$0xff]
      %v749 = vld [vmem:[#allocation3 + $0x10] sm:$0xff]
      %v750 = vld [vmem:[#allocation3 + $0x18] sm:$0xff]
      %v751 = vld [vmem:[#allocation3 + $0x20] sm:$0xff]
      %v752 = vld [vmem:[#allocation3 + $0x28] sm:$0xff]
      %v753 = vld [vmem:[#allocation3 + $0x30] sm:$0xff]
      %v754 = vld [vmem:[#allocation3 + $0x38] sm:$0xff]
      %v755 = vld [vmem:[#allocation3 + $0x40] sm:$0xff]
      %v756 = vld [vmem:[#allocation3 + $0x48] sm:$0xff]
      %v757 = vld [vmem:[#allocation3 + $0x50] sm:$0xff]
      %v758 = vld [vmem:[#allocation3 + $0x58] sm:$0xff]
      %v759 = vld [vmem:[#allocation3 + $0x60] sm:$0xff]
      %v760 = vld [vmem:[#allocation3 + $0x68] sm:$0xff]
      %v761 = vld [vmem:[#allocation3 + $0x70] sm:$0xff]
      %v762 = vld [vmem:[#allocation3 + $0x78] sm:$0xff]
      %v763 = vld [vmem:[#allocation3 + $0x80] sm:$0xff]
      %v764 = vld [vmem:[#allocation3 + $0x88] sm:$0xff]
      %v765 = vld [vmem:[#allocation3 + $0x90] sm:$0xff]
      %v766 = vld [vmem:[#allocation3 + $0x98] sm:$0xff]
      %v767 = vld [vmem:[#allocation3 + $0xa0] sm:$0xff]
      %v768 = vld [vmem:[#allocation3 + $0xa8] sm:$0xff]
      %v769 = vld [vmem:[#allocation3 + $0xb0] sm:$0xff]
      %v770 = vld [vmem:[#allocation3 + $0xb8] sm:$0xff]
      %v771 = vld [vmem:[#allocation3 + $0xc0] sm:$0xff]
      %v772 = vld [vmem:[#allocation3 + $0xc8] sm:$0xff]
      %v773 = vld [vmem:[#allocation3 + $0xd0] sm:$0xff]
      %v774 = vld [vmem:[#allocation3 + $0xd8] sm:$0xff]
      %v775 = vld [vmem:[#allocation3 + $0xe0] sm:$0xff]
      %v776 = vld [vmem:[#allocation3 + $0xe8] sm:$0xff]
      %v777 = vld [vmem:[#allocation3 + $0xf0] sm:$0xff]
      %v778 = vld [vmem:[#allocation3 + $0xf8] sm:$0xff]
      %v779 = vld [vmem:[#allocation3 + $0x100] sm:$0xff]
      %v780 = vld [vmem:[#allocation3 + $0x108] sm:$0xff]
      %v781 = vld [vmem:[#allocation3 + $0x110] sm:$0xff]
      %v782 = vld [vmem:[#allocation3 + $0x118] sm:$0xff]
      %v783 = vld [vmem:[#allocation3 + $0x120] sm:$0xff]
      %v784 = vld [vmem:[#allocation3 + $0x128] sm:$0xff]
      %v785 = vld [vmem:[#allocation3 + $0x130] sm:$0xff]
      %v786 = vld [vmem:[#allocation3 + $0x138] sm:$0xff]
      %v787 = vld [vmem:[#allocation3 + $0x140] sm:$0xff]
      %v788 = vld [vmem:[#allocation3 + $0x148] sm:$0xff]
      %v789 = vld [vmem:[#allocation3 + $0x150] sm:$0xff]
      %v790 = vld [vmem:[#allocation3 + $0x158] sm:$0xff]
      %v791 = vld [vmem:[#allocation3 + $0x160] sm:$0xff]
      %v792 = vld [vmem:[#allocation3 + $0x168] sm:$0xff]
      %v793 = vld [vmem:[#allocation3 + $0x170] sm:$0xff]
      %v794 = vld [vmem:[#allocation3 + $0x178] sm:$0xff]
      %v795 = vld [vmem:[#allocation3 + $0x180] sm:$0xff]
      %v796 = vld [vmem:[#allocation3 + $0x188] sm:$0xff]
      %v797 = vld [vmem:[#allocation3 + $0x190] sm:$0xff]
      %v798 = vld [vmem:[#allocation3 + $0x198] sm:$0xff]
      %v799 = vld [vmem:[#allocation3 + $0x1a0] sm:$0xff]
      %v800 = vld [vmem:[#allocation3 + $0x1a8] sm:$0xff]
      %v801 = vld [vmem:[#allocation3 + $0x1b0] sm:$0xff]
      %v802 = vld [vmem:[#allocation3 + $0x1b8] sm:$0xff]
      %v803 = vld [vmem:[#allocation3 + $0x1c0] sm:$0xff]
      %v804 = vld [vmem:[#allocation3 + $0x1c8] sm:$0xff]
      %v805 = vld [vmem:[#allocation3 + $0x1d0] sm:$0xff]
      %v806 = vld [vmem:[#allocation3 + $0x1d8] sm:$0xff]
      %v807 = vld [vmem:[#allocation3 + $0x1e0] sm:$0xff]
      %v808 = vld [vmem:[#allocation3 + $0x1e8] sm:$0xff]
      %v809 = vld [vmem:[#allocation3 + $0x1f0] sm:$0xff]
      %v810 = vld [vmem:[#allocation3 + $0x1f8] sm:$0xff]
      %v811 = vsel %vm425, %v297, -inf
      %812 = vmax.xlane.f32.xlu0 %v811
      %v813 = vpop.xlane.xlu0 %812
      %v814 = vsel %vm425, %v298, -inf
      %815 = vmax.xlane.f32.xlu0 %v814
      %v816 = vpop.xlane.xlu0 %815
      %v817 = vsel %vm425, %v299, -inf
      %818 = vmax.xlane.f32.xlu0 %v817
      %v819 = vpop.xlane.xlu0 %818
      %v820 = vsel %vm425, %v300, -inf
      %821 = vmax.xlane.f32.xlu0 %v820
      %v822 = vpop.xlane.xlu0 %821
      %v823 = vsel %vm425, %v301, -inf
      %824 = vmax.xlane.f32.xlu0 %v823
      %v825 = vpop.xlane.xlu0 %824
      %v826 = vsel %vm425, %v302, -inf
      %827 = vmax.xlane.f32.xlu0 %v826
      %v828 = vpop.xlane.xlu0 %827
      %v829 = vsel %vm425, %v303, -inf
      %830 = vmax.xlane.f32.xlu0 %v829
      %v831 = vpop.xlane.xlu0 %830
      %v832 = vsel %vm425, %v304, -inf
      %833 = vmax.xlane.f32.xlu0 %v832
      %v834 = vpop.xlane.xlu0 %833
      %v835 = vsel %vm425, %v305, -inf
      %836 = vmax.xlane.f32.xlu0 %v835
      %v837 = vpop.xlane.xlu0 %836
      %v838 = vsel %vm425, %v306, -inf
      %839 = vmax.xlane.f32.xlu0 %v838
      %v840 = vpop.xlane.xlu0 %839
      %v841 = vsel %vm425, %v307, -inf
      %842 = vmax.xlane.f32.xlu0 %v841
      %v843 = vpop.xlane.xlu0 %842
      %v844 = vsel %vm425, %v308, -inf
      %845 = vmax.xlane.f32.xlu0 %v844
      %v846 = vpop.xlane.xlu0 %845
      %v847 = vsel %vm425, %v309, -inf
      %848 = vmax.xlane.f32.xlu0 %v847
      %v849 = vpop.xlane.xlu0 %848
      %v850 = vsel %vm425, %v310, -inf
      %851 = vmax.xlane.f32.xlu0 %v850
      %v852 = vpop.xlane.xlu0 %851
      %v853 = vsel %vm425, %v311, -inf
      %854 = vmax.xlane.f32.xlu0 %v853
      %v855 = vpop.xlane.xlu0 %854
      %v856 = vsel %vm425, %v312, -inf
      %857 = vmax.xlane.f32.xlu0 %v856
      %v858 = vpop.xlane.xlu0 %857
      %v859 = vsel %vm425, %v313, -inf
      %860 = vmax.xlane.f32.xlu0 %v859
      %v861 = vpop.xlane.xlu0 %860
      %v862 = vsel %vm425, %v314, -inf
      %863 = vmax.xlane.f32.xlu0 %v862
      %v864 = vpop.xlane.xlu0 %863
      %v865 = vsel %vm425, %v315, -inf
      %866 = vmax.xlane.f32.xlu0 %v865
      %v867 = vpop.xlane.xlu0 %866
      %v868 = vsel %vm425, %v316, -inf
      %869 = vmax.xlane.f32.xlu0 %v868
      %v870 = vpop.xlane.xlu0 %869
      %v871 = vsel %vm425, %v317, -inf
      %872 = vmax.xlane.f32.xlu0 %v871
      %v873 = vpop.xlane.xlu0 %872
      %v874 = vsel %vm425, %v318, -inf
      %875 = vmax.xlane.f32.xlu0 %v874
      %v876 = vpop.xlane.xlu0 %875
      %v877 = vsel %vm425, %v319, -inf
      %878 = vmax.xlane.f32.xlu0 %v877
      %v879 = vpop.xlane.xlu0 %878
      %v880 = vsel %vm425, %v320, -inf
      %881 = vmax.xlane.f32.xlu0 %v880
      %v882 = vpop.xlane.xlu0 %881
      %v883 = vsel %vm425, %v321, -inf
      %884 = vmax.xlane.f32.xlu0 %v883
      %v885 = vpop.xlane.xlu0 %884
      %v886 = vsel %vm425, %v322, -inf
      %887 = vmax.xlane.f32.xlu0 %v886
      %v888 = vpop.xlane.xlu0 %887
      %v889 = vsel %vm425, %v323, -inf
      %890 = vmax.xlane.f32.xlu0 %v889
      %v891 = vpop.xlane.xlu0 %890
      %v892 = vsel %vm425, %v324, -inf
      %893 = vmax.xlane.f32.xlu0 %v892
      %v894 = vpop.xlane.xlu0 %893
      %v895 = vsel %vm425, %v325, -inf
      %896 = vmax.xlane.f32.xlu0 %v895
      %v897 = vpop.xlane.xlu0 %896
      %v898 = vsel %vm425, %v326, -inf
      %899 = vmax.xlane.f32.xlu0 %v898
      %v900 = vpop.xlane.xlu0 %899
      %v901 = vsel %vm425, %v327, -inf
      %902 = vmax.xlane.f32.xlu0 %v901
      %v903 = vpop.xlane.xlu0 %902
      %v904 = vsel %vm425, %v328, -inf
      %905 = vmax.xlane.f32.xlu0 %v904
      %v906 = vpop.xlane.xlu0 %905
      %v907 = vsel %vm425, %v329, -inf
      %908 = vmax.xlane.f32.xlu0 %v907
      %v909 = vpop.xlane.xlu0 %908
      %v910 = vsel %vm425, %v330, -inf
      %911 = vmax.xlane.f32.xlu0 %v910
      %v912 = vpop.xlane.xlu0 %911
      %v913 = vsel %vm425, %v331, -inf
      %914 = vmax.xlane.f32.xlu0 %v913
      %v915 = vpop.xlane.xlu0 %914
      %v916 = vsel %vm425, %v332, -inf
      %917 = vmax.xlane.f32.xlu0 %v916
      %v918 = vpop.xlane.xlu0 %917
      %v919 = vsel %vm425, %v333, -inf
      %920 = vmax.xlane.f32.xlu0 %v919
      %v921 = vpop.xlane.xlu0 %920
      %v922 = vsel %vm425, %v334, -inf
      %923 = vmax.xlane.f32.xlu0 %v922
      %v924 = vpop.xlane.xlu0 %923
      %v925 = vsel %vm425, %v335, -inf
      %926 = vmax.xlane.f32.xlu0 %v925
      %v927 = vpop.xlane.xlu0 %926
      %v928 = vsel %vm425, %v336, -inf
      %929 = vmax.xlane.f32.xlu0 %v928
      %v930 = vpop.xlane.xlu0 %929
      %v931 = vsel %vm425, %v337, -inf
      %932 = vmax.xlane.f32.xlu0 %v931
      %v933 = vpop.xlane.xlu0 %932
      %v934 = vsel %vm425, %v338, -inf
      %935 = vmax.xlane.f32.xlu0 %v934
      %v936 = vpop.xlane.xlu0 %935
      %v937 = vsel %vm425, %v339, -inf
      %938 = vmax.xlane.f32.xlu0 %v937
      %v939 = vpop.xlane.xlu0 %938
      %v940 = vsel %vm425, %v340, -inf
      %941 = vmax.xlane.f32.xlu0 %v940
      %v942 = vpop.xlane.xlu0 %941
      %v943 = vsel %vm425, %v341, -inf
      %944 = vmax.xlane.f32.xlu0 %v943
      %v945 = vpop.xlane.xlu0 %944
      %v946 = vsel %vm425, %v342, -inf
      %947 = vmax.xlane.f32.xlu0 %v946
      %v948 = vpop.xlane.xlu0 %947
      %v949 = vsel %vm425, %v343, -inf
      %950 = vmax.xlane.f32.xlu0 %v949
      %v951 = vpop.xlane.xlu0 %950
      %v952 = vsel %vm425, %v344, -inf
      %953 = vmax.xlane.f32.xlu0 %v952
      %v954 = vpop.xlane.xlu0 %953
      %v955 = vsel %vm425, %v345, -inf
      %956 = vmax.xlane.f32.xlu0 %v955
      %v957 = vpop.xlane.xlu0 %956
      %v958 = vsel %vm425, %v346, -inf
      %959 = vmax.xlane.f32.xlu0 %v958
      %v960 = vpop.xlane.xlu0 %959
      %v961 = vsel %vm425, %v347, -inf
      %962 = vmax.xlane.f32.xlu0 %v961
      %v963 = vpop.xlane.xlu0 %962
      %v964 = vsel %vm425, %v348, -inf
      %965 = vmax.xlane.f32.xlu0 %v964
      %v966 = vpop.xlane.xlu0 %965
      %v967 = vsel %vm425, %v349, -inf
      %968 = vmax.xlane.f32.xlu0 %v967
      %v969 = vpop.xlane.xlu0 %968
      %v970 = vsel %vm425, %v350, -inf
      %971 = vmax.xlane.f32.xlu0 %v970
      %v972 = vpop.xlane.xlu0 %971
      %v973 = vsel %vm425, %v351, -inf
      %974 = vmax.xlane.f32.xlu0 %v973
      %v975 = vpop.xlane.xlu0 %974
      %v976 = vsel %vm425, %v352, -inf
      %977 = vmax.xlane.f32.xlu0 %v976
      %v978 = vpop.xlane.xlu0 %977
      %v979 = vsel %vm425, %v353, -inf
      %980 = vmax.xlane.f32.xlu0 %v979
      %v981 = vpop.xlane.xlu0 %980
      %v982 = vsel %vm425, %v354, -inf
      %983 = vmax.xlane.f32.xlu0 %v982
      %v984 = vpop.xlane.xlu0 %983
      %v985 = vsel %vm425, %v355, -inf
      %986 = vmax.xlane.f32.xlu0 %v985
      %v987 = vpop.xlane.xlu0 %986
      %v988 = vsel %vm425, %v356, -inf
      %989 = vmax.xlane.f32.xlu0 %v988
      %v990 = vpop.xlane.xlu0 %989
      %v991 = vsel %vm425, %v357, -inf
      %992 = vmax.xlane.f32.xlu0 %v991
      %v993 = vpop.xlane.xlu0 %992
      %v994 = vsel %vm425, %v358, -inf
      %995 = vmax.xlane.f32.xlu0 %v994
      %v996 = vpop.xlane.xlu0 %995
      %v997 = vsel %vm425, %v359, -inf
      %998 = vmax.xlane.f32.xlu0 %v997
      %v999 = vpop.xlane.xlu0 %998
      %v1000 = vsel %vm425, %v360, -inf
      %1001 = vmax.xlane.f32.xlu0 %v1000
      %v1002 = vpop.xlane.xlu0 %1001
      %v1003 = vmax.f32 %v747, %v813
      %v1004 = vmax.f32 %v748, %v816
      %v1005 = vmax.f32 %v749, %v819
      %v1006 = vmax.f32 %v750, %v822
      %v1007 = vmax.f32 %v751, %v825
      %v1008 = vmax.f32 %v752, %v828
      %v1009 = vmax.f32 %v753, %v831
      %v1010 = vmax.f32 %v754, %v834
      %v1011 = vmax.f32 %v755, %v837
      %v1012 = vmax.f32 %v756, %v840
      %v1013 = vmax.f32 %v757, %v843
      %v1014 = vmax.f32 %v758, %v846
      %v1015 = vmax.f32 %v759, %v849
      %v1016 = vmax.f32 %v760, %v852
      %v1017 = vmax.f32 %v761, %v855
      %v1018 = vmax.f32 %v762, %v858
      %v1019 = vmax.f32 %v763, %v861
      %v1020 = vmax.f32 %v764, %v864
      %v1021 = vmax.f32 %v765, %v867
      %v1022 = vmax.f32 %v766, %v870
      %v1023 = vmax.f32 %v767, %v873
      %v1024 = vmax.f32 %v768, %v876
      %v1025 = vmax.f32 %v769, %v879
      %v1026 = vmax.f32 %v770, %v882
      %v1027 = vmax.f32 %v771, %v885
      %v1028 = vmax.f32 %v772, %v888
      %v1029 = vmax.f32 %v773, %v891
      %v1030 = vmax.f32 %v774, %v894
      %v1031 = vmax.f32 %v775, %v897
      %v1032 = vmax.f32 %v776, %v900
      %v1033 = vmax.f32 %v777, %v903
      %v1034 = vmax.f32 %v778, %v906
      %v1035 = vmax.f32 %v779, %v909
      %v1036 = vmax.f32 %v780, %v912
      %v1037 = vmax.f32 %v781, %v915
      %v1038 = vmax.f32 %v782, %v918
      %v1039 = vmax.f32 %v783, %v921
      %v1040 = vmax.f32 %v784, %v924
      %v1041 = vmax.f32 %v785, %v927
      %v1042 = vmax.f32 %v786, %v930
      %v1043 = vmax.f32 %v787, %v933
      %v1044 = vmax.f32 %v788, %v936
      %v1045 = vmax.f32 %v789, %v939
      %v1046 = vmax.f32 %v790, %v942
      %v1047 = vmax.f32 %v791, %v945
      %v1048 = vmax.f32 %v792, %v948
      %v1049 = vmax.f32 %v793, %v951
      %v1050 = vmax.f32 %v794, %v954
      %v1051 = vmax.f32 %v795, %v957
      %v1052 = vmax.f32 %v796, %v960
      %v1053 = vmax.f32 %v797, %v963
      %v1054 = vmax.f32 %v798, %v966
      %v1055 = vmax.f32 %v799, %v969
      %v1056 = vmax.f32 %v800, %v972
      %v1057 = vmax.f32 %v801, %v975
      %v1058 = vmax.f32 %v802, %v978
      %v1059 = vmax.f32 %v803, %v981
      %v1060 = vmax.f32 %v804, %v984
      %v1061 = vmax.f32 %v805, %v987
      %v1062 = vmax.f32 %v806, %v990
      %v1063 = vmax.f32 %v807, %v993
      %v1064 = vmax.f32 %v808, %v996
      %v1065 = vmax.f32 %v809, %v999
      %v1066 = vmax.f32 %v810, %v1002
      %1067 = vst.msk [vmem:[#allocation3] sm:$0xff] %vm682, %v1003
      %1068 = vst.msk [vmem:[#allocation3 + $0x8] sm:$0xff] %vm682, %v1004
      %1069 = vst.msk [vmem:[#allocation3 + $0x10] sm:$0xff] %vm682, %v1005
      %1070 = vst.msk [vmem:[#allocation3 + $0x18] sm:$0xff] %vm682, %v1006
      %1071 = vst.msk [vmem:[#allocation3 + $0x20] sm:$0xff] %vm682, %v1007
      %1072 = vst.msk [vmem:[#allocation3 + $0x28] sm:$0xff] %vm682, %v1008
      %1073 = vst.msk [vmem:[#allocation3 + $0x30] sm:$0xff] %vm682, %v1009
      %1074 = vst.msk [vmem:[#allocation3 + $0x38] sm:$0xff] %vm682, %v1010
      %1075 = vst.msk [vmem:[#allocation3 + $0x40] sm:$0xff] %vm682, %v1011
      %1076 = vst.msk [vmem:[#allocation3 + $0x48] sm:$0xff] %vm682, %v1012
      %1077 = vst.msk [vmem:[#allocation3 + $0x50] sm:$0xff] %vm682, %v1013
      %1078 = vst.msk [vmem:[#allocation3 + $0x58] sm:$0xff] %vm682, %v1014
      %1079 = vst.msk [vmem:[#allocation3 + $0x60] sm:$0xff] %vm682, %v1015
      %1080 = vst.msk [vmem:[#allocation3 + $0x68] sm:$0xff] %vm682, %v1016
      %1081 = vst.msk [vmem:[#allocation3 + $0x70] sm:$0xff] %vm682, %v1017
      %1082 = vst.msk [vmem:[#allocation3 + $0x78] sm:$0xff] %vm682, %v1018
      %1083 = vst.msk [vmem:[#allocation3 + $0x80] sm:$0xff] %vm682, %v1019
      %1084 = vst.msk [vmem:[#allocation3 + $0x88] sm:$0xff] %vm682, %v1020
      %1085 = vst.msk [vmem:[#allocation3 + $0x90] sm:$0xff] %vm682, %v1021
      %1086 = vst.msk [vmem:[#allocation3 + $0x98] sm:$0xff] %vm682, %v1022
      %1087 = vst.msk [vmem:[#allocation3 + $0xa0] sm:$0xff] %vm682, %v1023
      %1088 = vst.msk [vmem:[#allocation3 + $0xa8] sm:$0xff] %vm682, %v1024
      %1089 = vst.msk [vmem:[#allocation3 + $0xb0] sm:$0xff] %vm682, %v1025
      %1090 = vst.msk [vmem:[#allocation3 + $0xb8] sm:$0xff] %vm682, %v1026
      %1091 = vst.msk [vmem:[#allocation3 + $0xc0] sm:$0xff] %vm682, %v1027
      %1092 = vst.msk [vmem:[#allocation3 + $0xc8] sm:$0xff] %vm682, %v1028
      %1093 = vst.msk [vmem:[#allocation3 + $0xd0] sm:$0xff] %vm682, %v1029
      %1094 = vst.msk [vmem:[#allocation3 + $0xd8] sm:$0xff] %vm682, %v1030
      %1095 = vst.msk [vmem:[#allocation3 + $0xe0] sm:$0xff] %vm682, %v1031
      %1096 = vst.msk [vmem:[#allocation3 + $0xe8] sm:$0xff] %vm682, %v1032
      %1097 = vst.msk [vmem:[#allocation3 + $0xf0] sm:$0xff] %vm682, %v1033
      %1098 = vst.msk [vmem:[#allocation3 + $0xf8] sm:$0xff] %vm682, %v1034
      %1099 = vst.msk [vmem:[#allocation3 + $0x100] sm:$0xff] %vm682, %v1035
      %1100 = vst.msk [vmem:[#allocation3 + $0x108] sm:$0xff] %vm682, %v1036
      %1101 = vst.msk [vmem:[#allocation3 + $0x110] sm:$0xff] %vm682, %v1037
      %1102 = vst.msk [vmem:[#allocation3 + $0x118] sm:$0xff] %vm682, %v1038
      %1103 = vst.msk [vmem:[#allocation3 + $0x120] sm:$0xff] %vm682, %v1039
      %1104 = vst.msk [vmem:[#allocation3 + $0x128] sm:$0xff] %vm682, %v1040
      %1105 = vst.msk [vmem:[#allocation3 + $0x130] sm:$0xff] %vm682, %v1041
      %1106 = vst.msk [vmem:[#allocation3 + $0x138] sm:$0xff] %vm682, %v1042
      %1107 = vst.msk [vmem:[#allocation3 + $0x140] sm:$0xff] %vm682, %v1043
      %1108 = vst.msk [vmem:[#allocation3 + $0x148] sm:$0xff] %vm682, %v1044
      %1109 = vst.msk [vmem:[#allocation3 + $0x150] sm:$0xff] %vm682, %v1045
      %1110 = vst.msk [vmem:[#allocation3 + $0x158] sm:$0xff] %vm682, %v1046
      %1111 = vst.msk [vmem:[#allocation3 + $0x160] sm:$0xff] %vm682, %v1047
      %1112 = vst.msk [vmem:[#allocation3 + $0x168] sm:$0xff] %vm682, %v1048
      %1113 = vst.msk [vmem:[#allocation3 + $0x170] sm:$0xff] %vm682, %v1049
      %1114 = vst.msk [vmem:[#allocation3 + $0x178] sm:$0xff] %vm682, %v1050
      %1115 = vst.msk [vmem:[#allocation3 + $0x180] sm:$0xff] %vm682, %v1051
      %1116 = vst.msk [vmem:[#allocation3 + $0x188] sm:$0xff] %vm682, %v1052
      %1117 = vst.msk [vmem:[#allocation3 + $0x190] sm:$0xff] %vm682, %v1053
      %1118 = vst.msk [vmem:[#allocation3 + $0x198] sm:$0xff] %vm682, %v1054
      %1119 = vst.msk [vmem:[#allocation3 + $0x1a0] sm:$0xff] %vm682, %v1055
      %1120 = vst.msk [vmem:[#allocation3 + $0x1a8] sm:$0xff] %vm682, %v1056
      %1121 = vst.msk [vmem:[#allocation3 + $0x1b0] sm:$0xff] %vm682, %v1057
      %1122 = vst.msk [vmem:[#allocation3 + $0x1b8] sm:$0xff] %vm682, %v1058
      %1123 = vst.msk [vmem:[#allocation3 + $0x1c0] sm:$0xff] %vm682, %v1059
      %1124 = vst.msk [vmem:[#allocation3 + $0x1c8] sm:$0xff] %vm682, %v1060
      %1125 = vst.msk [vmem:[#allocation3 + $0x1d0] sm:$0xff] %vm682, %v1061
      %1126 = vst.msk [vmem:[#allocation3 + $0x1d8] sm:$0xff] %vm682, %v1062
      %1127 = vst.msk [vmem:[#allocation3 + $0x1e0] sm:$0xff] %vm682, %v1063
      %1128 = vst.msk [vmem:[#allocation3 + $0x1e8] sm:$0xff] %vm682, %v1064
      %1129 = vst.msk [vmem:[#allocation3 + $0x1f0] sm:$0xff] %vm682, %v1065
      %1130 = vst.msk [vmem:[#allocation3 + $0x1f8] sm:$0xff] %vm682, %v1066
      // Predicated region
      $region29: #{tpu_custom_call.1} parent=23 // pred_check
        %p1131 = pneg %p164
      $region30: #{tpu_custom_call.1} parent=23 // pred_check_branch
        %1133 = sbr.rel (%p1131) target = $region32
      $region31: #{tpu_custom_call.1} parent=23 // pred_region
        %v1134 = vld [vmem:[#allocation2] sm:$0xff]
        %v1135 = vld [vmem:[#allocation2 + $0x8] sm:$0xff]
        %v1136 = vld [vmem:[#allocation2 + $0x10] sm:$0xff]
        %v1137 = vld [vmem:[#allocation2 + $0x18] sm:$0xff]
        %v1138 = vld [vmem:[#allocation2 + $0x20] sm:$0xff]
        %v1139 = vld [vmem:[#allocation2 + $0x28] sm:$0xff]
        %v1140 = vld [vmem:[#allocation2 + $0x30] sm:$0xff]
        %v1141 = vld [vmem:[#allocation2 + $0x38] sm:$0xff]
        %v1142 = vld [vmem:[#allocation2 + $0x40] sm:$0xff]
        %v1143 = vld [vmem:[#allocation2 + $0x48] sm:$0xff]
        %v1144 = vld [vmem:[#allocation2 + $0x50] sm:$0xff]
        %v1145 = vld [vmem:[#allocation2 + $0x58] sm:$0xff]
        %v1146 = vld [vmem:[#allocation2 + $0x60] sm:$0xff]
        %v1147 = vld [vmem:[#allocation2 + $0x68] sm:$0xff]
        %v1148 = vld [vmem:[#allocation2 + $0x70] sm:$0xff]
        %v1149 = vld [vmem:[#allocation2 + $0x78] sm:$0xff]
        %v1150 = vld [vmem:[#allocation2 + $0x80] sm:$0xff]
        %v1151 = vld [vmem:[#allocation2 + $0x88] sm:$0xff]
        %v1152 = vld [vmem:[#allocation2 + $0x90] sm:$0xff]
        %v1153 = vld [vmem:[#allocation2 + $0x98] sm:$0xff]
        %v1154 = vld [vmem:[#allocation2 + $0xa0] sm:$0xff]
        %v1155 = vld [vmem:[#allocation2 + $0xa8] sm:$0xff]
        %v1156 = vld [vmem:[#allocation2 + $0xb0] sm:$0xff]
        %v1157 = vld [vmem:[#allocation2 + $0xb8] sm:$0xff]
        %v1158 = vld [vmem:[#allocation2 + $0xc0] sm:$0xff]
        %v1159 = vld [vmem:[#allocation2 + $0xc8] sm:$0xff]
        %v1160 = vld [vmem:[#allocation2 + $0xd0] sm:$0xff]
        %v1161 = vld [vmem:[#allocation2 + $0xd8] sm:$0xff]
        %v1162 = vld [vmem:[#allocation2 + $0xe0] sm:$0xff]
        %v1163 = vld [vmem:[#allocation2 + $0xe8] sm:$0xff]
        %v1164 = vld [vmem:[#allocation2 + $0xf0] sm:$0xff]
        %v1165 = vld [vmem:[#allocation2 + $0xf8] sm:$0xff]
        %v1166 = vld [vmem:[#allocation2 + $0x100] sm:$0xff]
        %v1167 = vld [vmem:[#allocation2 + $0x108] sm:$0xff]
        %v1168 = vld [vmem:[#allocation2 + $0x110] sm:$0xff]
        %v1169 = vld [vmem:[#allocation2 + $0x118] sm:$0xff]
        %v1170 = vld [vmem:[#allocation2 + $0x120] sm:$0xff]
        %v1171 = vld [vmem:[#allocation2 + $0x128] sm:$0xff]
        %v1172 = vld [vmem:[#allocation2 + $0x130] sm:$0xff]
        %v1173 = vld [vmem:[#allocation2 + $0x138] sm:$0xff]
        %v1174 = vld [vmem:[#allocation2 + $0x140] sm:$0xff]
        %v1175 = vld [vmem:[#allocation2 + $0x148] sm:$0xff]
        %v1176 = vld [vmem:[#allocation2 + $0x150] sm:$0xff]
        %v1177 = vld [vmem:[#allocation2 + $0x158] sm:$0xff]
        %v1178 = vld [vmem:[#allocation2 + $0x160] sm:$0xff]
        %v1179 = vld [vmem:[#allocation2 + $0x168] sm:$0xff]
        %v1180 = vld [vmem:[#allocation2 + $0x170] sm:$0xff]
        %v1181 = vld [vmem:[#allocation2 + $0x178] sm:$0xff]
        %v1182 = vld [vmem:[#allocation2 + $0x180] sm:$0xff]
        %v1183 = vld [vmem:[#allocation2 + $0x188] sm:$0xff]
        %v1184 = vld [vmem:[#allocation2 + $0x190] sm:$0xff]
        %v1185 = vld [vmem:[#allocation2 + $0x198] sm:$0xff]
        %v1186 = vld [vmem:[#allocation2 + $0x1a0] sm:$0xff]
        %v1187 = vld [vmem:[#allocation2 + $0x1a8] sm:$0xff]
        %v1188 = vld [vmem:[#allocation2 + $0x1b0] sm:$0xff]
        %v1189 = vld [vmem:[#allocation2 + $0x1b8] sm:$0xff]
        %v1190 = vld [vmem:[#allocation2 + $0x1c0] sm:$0xff]
        %v1191 = vld [vmem:[#allocation2 + $0x1c8] sm:$0xff]
        %v1192 = vld [vmem:[#allocation2 + $0x1d0] sm:$0xff]
        %v1193 = vld [vmem:[#allocation2 + $0x1d8] sm:$0xff]
        %v1194 = vld [vmem:[#allocation2 + $0x1e0] sm:$0xff]
        %v1195 = vld [vmem:[#allocation2 + $0x1e8] sm:$0xff]
        %v1196 = vld [vmem:[#allocation2 + $0x1f0] sm:$0xff]
        %v1197 = vld [vmem:[#allocation2 + $0x1f8] sm:$0xff]
        %v1198 = vld [vmem:[#allocation3] sm:$0xff]
        %v1199 = vld [vmem:[#allocation3 + $0x8] sm:$0xff]
        %v1200 = vld [vmem:[#allocation3 + $0x10] sm:$0xff]
        %v1201 = vld [vmem:[#allocation3 + $0x18] sm:$0xff]
        %v1202 = vld [vmem:[#allocation3 + $0x20] sm:$0xff]
        %v1203 = vld [vmem:[#allocation3 + $0x28] sm:$0xff]
        %v1204 = vld [vmem:[#allocation3 + $0x30] sm:$0xff]
        %v1205 = vld [vmem:[#allocation3 + $0x38] sm:$0xff]
        %v1206 = vld [vmem:[#allocation3 + $0x40] sm:$0xff]
        %v1207 = vld [vmem:[#allocation3 + $0x48] sm:$0xff]
        %v1208 = vld [vmem:[#allocation3 + $0x50] sm:$0xff]
        %v1209 = vld [vmem:[#allocation3 + $0x58] sm:$0xff]
        %v1210 = vld [vmem:[#allocation3 + $0x60] sm:$0xff]
        %v1211 = vld [vmem:[#allocation3 + $0x68] sm:$0xff]
        %v1212 = vld [vmem:[#allocation3 + $0x70] sm:$0xff]
        %v1213 = vld [vmem:[#allocation3 + $0x78] sm:$0xff]
        %v1214 = vld [vmem:[#allocation3 + $0x80] sm:$0xff]
        %v1215 = vld [vmem:[#allocation3 + $0x88] sm:$0xff]
        %v1216 = vld [vmem:[#allocation3 + $0x90] sm:$0xff]
        %v1217 = vld [vmem:[#allocation3 + $0x98] sm:$0xff]
        %v1218 = vld [vmem:[#allocation3 + $0xa0] sm:$0xff]
        %v1219 = vld [vmem:[#allocation3 + $0xa8] sm:$0xff]
        %v1220 = vld [vmem:[#allocation3 + $0xb0] sm:$0xff]
        %v1221 = vld [vmem:[#allocation3 + $0xb8] sm:$0xff]
        %v1222 = vld [vmem:[#allocation3 + $0xc0] sm:$0xff]
        %v1223 = vld [vmem:[#allocation3 + $0xc8] sm:$0xff]
        %v1224 = vld [vmem:[#allocation3 + $0xd0] sm:$0xff]
        %v1225 = vld [vmem:[#allocation3 + $0xd8] sm:$0xff]
        %v1226 = vld [vmem:[#allocation3 + $0xe0] sm:$0xff]
        %v1227 = vld [vmem:[#allocation3 + $0xe8] sm:$0xff]
        %v1228 = vld [vmem:[#allocation3 + $0xf0] sm:$0xff]
        %v1229 = vld [vmem:[#allocation3 + $0xf8] sm:$0xff]
        %v1230 = vld [vmem:[#allocation3 + $0x100] sm:$0xff]
        %v1231 = vld [vmem:[#allocation3 + $0x108] sm:$0xff]
        %v1232 = vld [vmem:[#allocation3 + $0x110] sm:$0xff]
        %v1233 = vld [vmem:[#allocation3 + $0x118] sm:$0xff]
        %v1234 = vld [vmem:[#allocation3 + $0x120] sm:$0xff]
        %v1235 = vld [vmem:[#allocation3 + $0x128] sm:$0xff]
        %v1236 = vld [vmem:[#allocation3 + $0x130] sm:$0xff]
        %v1237 = vld [vmem:[#allocation3 + $0x138] sm:$0xff]
        %v1238 = vld [vmem:[#allocation3 + $0x140] sm:$0xff]
        %v1239 = vld [vmem:[#allocation3 + $0x148] sm:$0xff]
        %v1240 = vld [vmem:[#allocation3 + $0x150] sm:$0xff]
        %v1241 = vld [vmem:[#allocation3 + $0x158] sm:$0xff]
        %v1242 = vld [vmem:[#allocation3 + $0x160] sm:$0xff]
        %v1243 = vld [vmem:[#allocation3 + $0x168] sm:$0xff]
        %v1244 = vld [vmem:[#allocation3 + $0x170] sm:$0xff]
        %v1245 = vld [vmem:[#allocation3 + $0x178] sm:$0xff]
        %v1246 = vld [vmem:[#allocation3 + $0x180] sm:$0xff]
        %v1247 = vld [vmem:[#allocation3 + $0x188] sm:$0xff]
        %v1248 = vld [vmem:[#allocation3 + $0x190] sm:$0xff]
        %v1249 = vld [vmem:[#allocation3 + $0x198] sm:$0xff]
        %v1250 = vld [vmem:[#allocation3 + $0x1a0] sm:$0xff]
        %v1251 = vld [vmem:[#allocation3 + $0x1a8] sm:$0xff]
        %v1252 = vld [vmem:[#allocation3 + $0x1b0] sm:$0xff]
        %v1253 = vld [vmem:[#allocation3 + $0x1b8] sm:$0xff]
        %v1254 = vld [vmem:[#allocation3 + $0x1c0] sm:$0xff]
        %v1255 = vld [vmem:[#allocation3 + $0x1c8] sm:$0xff]
        %v1256 = vld [vmem:[#allocation3 + $0x1d0] sm:$0xff]
        %v1257 = vld [vmem:[#allocation3 + $0x1d8] sm:$0xff]
        %v1258 = vld [vmem:[#allocation3 + $0x1e0] sm:$0xff]
        %v1259 = vld [vmem:[#allocation3 + $0x1e8] sm:$0xff]
        %v1260 = vld [vmem:[#allocation3 + $0x1f0] sm:$0xff]
        %v1261 = vld [vmem:[#allocation3 + $0x1f8] sm:$0xff]
        %1326 = vrot.lane.b32.xlu0 %v1198, 1
        %v1327 = vpop.permute.xlu0 %1326
        %1328 = vrot.lane.b32.xlu0 %v1199, 1
        %v1329 = vpop.permute.xlu0 %1328
        %1330 = vrot.lane.b32.xlu0 %v1200, 1
        %v1331 = vpop.permute.xlu0 %1330
        %1332 = vrot.lane.b32.xlu0 %v1201, 1
        %v1333 = vpop.permute.xlu0 %1332
        %1334 = vrot.lane.b32.xlu0 %v1202, 1
        %v1335 = vpop.permute.xlu0 %1334
        %1336 = vrot.lane.b32.xlu0 %v1203, 1
        %v1337 = vpop.permute.xlu0 %1336
        %1338 = vrot.lane.b32.xlu0 %v1204, 1
        %v1339 = vpop.permute.xlu0 %1338
        %1340 = vrot.lane.b32.xlu0 %v1205, 1
        %v1341 = vpop.permute.xlu0 %1340
        %1342 = vrot.lane.b32.xlu0 %v1206, 1
        %v1343 = vpop.permute.xlu0 %1342
        %1344 = vrot.lane.b32.xlu0 %v1207, 1
        %v1345 = vpop.permute.xlu0 %1344
        %1346 = vrot.lane.b32.xlu0 %v1208, 1
        %v1347 = vpop.permute.xlu0 %1346
        %1348 = vrot.lane.b32.xlu0 %v1209, 1
        %v1349 = vpop.permute.xlu0 %1348
        %1350 = vrot.lane.b32.xlu0 %v1210, 1
        %v1351 = vpop.permute.xlu0 %1350
        %1352 = vrot.lane.b32.xlu0 %v1211, 1
        %v1353 = vpop.permute.xlu0 %1352
        %1354 = vrot.lane.b32.xlu0 %v1212, 1
        %v1355 = vpop.permute.xlu0 %1354
        %1356 = vrot.lane.b32.xlu0 %v1213, 1
        %v1357 = vpop.permute.xlu0 %1356
        %1358 = vrot.lane.b32.xlu0 %v1214, 1
        %v1359 = vpop.permute.xlu0 %1358
        %1360 = vrot.lane.b32.xlu0 %v1215, 1
        %v1361 = vpop.permute.xlu0 %1360
        %1362 = vrot.lane.b32.xlu0 %v1216, 1
        %v1363 = vpop.permute.xlu0 %1362
        %1364 = vrot.lane.b32.xlu0 %v1217, 1
        %v1365 = vpop.permute.xlu0 %1364
        %1366 = vrot.lane.b32.xlu0 %v1218, 1
        %v1367 = vpop.permute.xlu0 %1366
        %1368 = vrot.lane.b32.xlu0 %v1219, 1
        %v1369 = vpop.permute.xlu0 %1368
        %1370 = vrot.lane.b32.xlu0 %v1220, 1
        %v1371 = vpop.permute.xlu0 %1370
        %1372 = vrot.lane.b32.xlu0 %v1221, 1
        %v1373 = vpop.permute.xlu0 %1372
        %1374 = vrot.lane.b32.xlu0 %v1222, 1
        %v1375 = vpop.permute.xlu0 %1374
        %1376 = vrot.lane.b32.xlu0 %v1223, 1
        %v1377 = vpop.permute.xlu0 %1376
        %1378 = vrot.lane.b32.xlu0 %v1224, 1
        %v1379 = vpop.permute.xlu0 %1378
        %1380 = vrot.lane.b32.xlu0 %v1225, 1
        %v1381 = vpop.permute.xlu0 %1380
        %1382 = vrot.lane.b32.xlu0 %v1226, 1
        %v1383 = vpop.permute.xlu0 %1382
        %1384 = vrot.lane.b32.xlu0 %v1227, 1
        %v1385 = vpop.permute.xlu0 %1384
        %1386 = vrot.lane.b32.xlu0 %v1228, 1
        %v1387 = vpop.permute.xlu0 %1386
        %1388 = vrot.lane.b32.xlu0 %v1229, 1
        %v1389 = vpop.permute.xlu0 %1388
        %1390 = vrot.lane.b32.xlu0 %v1230, 1
        %v1391 = vpop.permute.xlu0 %1390
        %1392 = vrot.lane.b32.xlu0 %v1231, 1
        %v1393 = vpop.permute.xlu0 %1392
        %1394 = vrot.lane.b32.xlu0 %v1232, 1
        %v1395 = vpop.permute.xlu0 %1394
        %1396 = vrot.lane.b32.xlu0 %v1233, 1
        %v1397 = vpop.permute.xlu0 %1396
        %1398 = vrot.lane.b32.xlu0 %v1234, 1
        %v1399 = vpop.permute.xlu0 %1398
        %1400 = vrot.lane.b32.xlu0 %v1235, 1
        %v1401 = vpop.permute.xlu0 %1400
        %1402 = vrot.lane.b32.xlu0 %v1236, 1
        %v1403 = vpop.permute.xlu0 %1402
        %1404 = vrot.lane.b32.xlu0 %v1237, 1
        %v1405 = vpop.permute.xlu0 %1404
        %1406 = vrot.lane.b32.xlu0 %v1238, 1
        %v1407 = vpop.permute.xlu0 %1406
        %1408 = vrot.lane.b32.xlu0 %v1239, 1
        %v1409 = vpop.permute.xlu0 %1408
        %1410 = vrot.lane.b32.xlu0 %v1240, 1
        %v1411 = vpop.permute.xlu0 %1410
        %1412 = vrot.lane.b32.xlu0 %v1241, 1
        %v1413 = vpop.permute.xlu0 %1412
        %1414 = vrot.lane.b32.xlu0 %v1242, 1
        %v1415 = vpop.permute.xlu0 %1414
        %1416 = vrot.lane.b32.xlu0 %v1243, 1
        %v1417 = vpop.permute.xlu0 %1416
        %1418 = vrot.lane.b32.xlu0 %v1244, 1
        %v1419 = vpop.permute.xlu0 %1418
        %1420 = vrot.lane.b32.xlu0 %v1245, 1
        %v1421 = vpop.permute.xlu0 %1420
        %1422 = vrot.lane.b32.xlu0 %v1246, 1
        %v1423 = vpop.permute.xlu0 %1422
        %1424 = vrot.lane.b32.xlu0 %v1247, 1
        %v1425 = vpop.permute.xlu0 %1424
        %1426 = vrot.lane.b32.xlu0 %v1248, 1
        %v1427 = vpop.permute.xlu0 %1426
        %1428 = vrot.lane.b32.xlu0 %v1249, 1
        %v1429 = vpop.permute.xlu0 %1428
        %1430 = vrot.lane.b32.xlu0 %v1250, 1
        %v1431 = vpop.permute.xlu0 %1430
        %1432 = vrot.lane.b32.xlu0 %v1251, 1
        %v1433 = vpop.permute.xlu0 %1432
        %1434 = vrot.lane.b32.xlu0 %v1252, 1
        %v1435 = vpop.permute.xlu0 %1434
        %1436 = vrot.lane.b32.xlu0 %v1253, 1
        %v1437 = vpop.permute.xlu0 %1436
        %1438 = vrot.lane.b32.xlu0 %v1254, 1
        %v1439 = vpop.permute.xlu0 %1438
        %1440 = vrot.lane.b32.xlu0 %v1255, 1
        %v1441 = vpop.permute.xlu0 %1440
        %1442 = vrot.lane.b32.xlu0 %v1256, 1
        %v1443 = vpop.permute.xlu0 %1442
        %1444 = vrot.lane.b32.xlu0 %v1257, 1
        %v1445 = vpop.permute.xlu0 %1444
        %1446 = vrot.lane.b32.xlu0 %v1258, 1
        %v1447 = vpop.permute.xlu0 %1446
        %1448 = vrot.lane.b32.xlu0 %v1259, 1
        %v1449 = vpop.permute.xlu0 %1448
        %1450 = vrot.lane.b32.xlu0 %v1260, 1
        %v1451 = vpop.permute.xlu0 %1450
        %1452 = vrot.lane.b32.xlu0 %v1261, 1
        %v1453 = vpop.permute.xlu0 %1452
        %v1518 = vsel %vm682, %v1134, %v1327
        %v1519 = vsel %vm682, %v1135, %v1329
        %v1520 = vsel %vm682, %v1136, %v1331
        %v1521 = vsel %vm682, %v1137, %v1333
        %v1522 = vsel %vm682, %v1138, %v1335
        %v1523 = vsel %vm682, %v1139, %v1337
        %v1524 = vsel %vm682, %v1140, %v1339
        %v1525 = vsel %vm682, %v1141, %v1341
        %v1526 = vsel %vm682, %v1142, %v1343
        %v1527 = vsel %vm682, %v1143, %v1345
        %v1528 = vsel %vm682, %v1144, %v1347
        %v1529 = vsel %vm682, %v1145, %v1349
        %v1530 = vsel %vm682, %v1146, %v1351
        %v1531 = vsel %vm682, %v1147, %v1353
        %v1532 = vsel %vm682, %v1148, %v1355
        %v1533 = vsel %vm682, %v1149, %v1357
        %v1534 = vsel %vm682, %v1150, %v1359
        %v1535 = vsel %vm682, %v1151, %v1361
        %v1536 = vsel %vm682, %v1152, %v1363
        %v1537 = vsel %vm682, %v1153, %v1365
        %v1538 = vsel %vm682, %v1154, %v1367
        %v1539 = vsel %vm682, %v1155, %v1369
        %v1540 = vsel %vm682, %v1156, %v1371
        %v1541 = vsel %vm682, %v1157, %v1373
        %v1542 = vsel %vm682, %v1158, %v1375
        %v1543 = vsel %vm682, %v1159, %v1377
        %v1544 = vsel %vm682, %v1160, %v1379
        %v1545 = vsel %vm682, %v1161, %v1381
        %v1546 = vsel %vm682, %v1162, %v1383
        %v1547 = vsel %vm682, %v1163, %v1385
        %v1548 = vsel %vm682, %v1164, %v1387
        %v1549 = vsel %vm682, %v1165, %v1389
        %v1550 = vsel %vm682, %v1166, %v1391
        %v1551 = vsel %vm682, %v1167, %v1393
        %v1552 = vsel %vm682, %v1168, %v1395
        %v1553 = vsel %vm682, %v1169, %v1397
        %v1554 = vsel %vm682, %v1170, %v1399
        %v1555 = vsel %vm682, %v1171, %v1401
        %v1556 = vsel %vm682, %v1172, %v1403
        %v1557 = vsel %vm682, %v1173, %v1405
        %v1558 = vsel %vm682, %v1174, %v1407
        %v1559 = vsel %vm682, %v1175, %v1409
        %v1560 = vsel %vm682, %v1176, %v1411
        %v1561 = vsel %vm682, %v1177, %v1413
        %v1562 = vsel %vm682, %v1178, %v1415
        %v1563 = vsel %vm682, %v1179, %v1417
        %v1564 = vsel %vm682, %v1180, %v1419
        %v1565 = vsel %vm682, %v1181, %v1421
        %v1566 = vsel %vm682, %v1182, %v1423
        %v1567 = vsel %vm682, %v1183, %v1425
        %v1568 = vsel %vm682, %v1184, %v1427
        %v1569 = vsel %vm682, %v1185, %v1429
        %v1570 = vsel %vm682, %v1186, %v1431
        %v1571 = vsel %vm682, %v1187, %v1433
        %v1572 = vsel %vm682, %v1188, %v1435
        %v1573 = vsel %vm682, %v1189, %v1437
        %v1574 = vsel %vm682, %v1190, %v1439
        %v1575 = vsel %vm682, %v1191, %v1441
        %v1576 = vsel %vm682, %v1192, %v1443
        %v1577 = vsel %vm682, %v1193, %v1445
        %v1578 = vsel %vm682, %v1194, %v1447
        %v1579 = vsel %vm682, %v1195, %v1449
        %v1580 = vsel %vm682, %v1196, %v1451
        %v1581 = vsel %vm682, %v1197, %v1453
        %vm1582 = vcmask 15360
        %1583 = vst.msk [vmem:[%s163] sm:$0xff] %vm1582, %v1518
        %1584 = vst.msk [vmem:[%s163 + $0x8] sm:$0xff] %vm1582, %v1519
        %1585 = vst.msk [vmem:[%s163 + $0x10] sm:$0xff] %vm1582, %v1520
        %1586 = vst.msk [vmem:[%s163 + $0x18] sm:$0xff] %vm1582, %v1521
        %1587 = vst.msk [vmem:[%s163 + $0x20] sm:$0xff] %vm1582, %v1522
        %1588 = vst.msk [vmem:[%s163 + $0x28] sm:$0xff] %vm1582, %v1523
        %1589 = vst.msk [vmem:[%s163 + $0x30] sm:$0xff] %vm1582, %v1524
        %1590 = vst.msk [vmem:[%s163 + $0x38] sm:$0xff] %vm1582, %v1525
        %1591 = vst.msk [vmem:[%s163 + $0x40] sm:$0xff] %vm1582, %v1526
        %1592 = vst.msk [vmem:[%s163 + $0x48] sm:$0xff] %vm1582, %v1527
        %1593 = vst.msk [vmem:[%s163 + $0x50] sm:$0xff] %vm1582, %v1528
        %1594 = vst.msk [vmem:[%s163 + $0x58] sm:$0xff] %vm1582, %v1529
        %1595 = vst.msk [vmem:[%s163 + $0x60] sm:$0xff] %vm1582, %v1530
        %1596 = vst.msk [vmem:[%s163 + $0x68] sm:$0xff] %vm1582, %v1531
        %1597 = vst.msk [vmem:[%s163 + $0x70] sm:$0xff] %vm1582, %v1532
        %1598 = vst.msk [vmem:[%s163 + $0x78] sm:$0xff] %vm1582, %v1533
        %1599 = vst.msk [vmem:[%s163 + $0x80] sm:$0xff] %vm1582, %v1534
        %1600 = vst.msk [vmem:[%s163 + $0x88] sm:$0xff] %vm1582, %v1535
        %1601 = vst.msk [vmem:[%s163 + $0x90] sm:$0xff] %vm1582, %v1536
        %1602 = vst.msk [vmem:[%s163 + $0x98] sm:$0xff] %vm1582, %v1537
        %1603 = vst.msk [vmem:[%s163 + $0xa0] sm:$0xff] %vm1582, %v1538
        %1604 = vst.msk [vmem:[%s163 + $0xa8] sm:$0xff] %vm1582, %v1539
        %1605 = vst.msk [vmem:[%s163 + $0xb0] sm:$0xff] %vm1582, %v1540
        %1606 = vst.msk [vmem:[%s163 + $0xb8] sm:$0xff] %vm1582, %v1541
        %1607 = vst.msk [vmem:[%s163 + $0xc0] sm:$0xff] %vm1582, %v1542
        %1608 = vst.msk [vmem:[%s163 + $0xc8] sm:$0xff] %vm1582, %v1543
        %1609 = vst.msk [vmem:[%s163 + $0xd0] sm:$0xff] %vm1582, %v1544
        %1610 = vst.msk [vmem:[%s163 + $0xd8] sm:$0xff] %vm1582, %v1545
        %1611 = vst.msk [vmem:[%s163 + $0xe0] sm:$0xff] %vm1582, %v1546
        %1612 = vst.msk [vmem:[%s163 + $0xe8] sm:$0xff] %vm1582, %v1547
        %1613 = vst.msk [vmem:[%s163 + $0xf0] sm:$0xff] %vm1582, %v1548
        %1614 = vst.msk [vmem:[%s163 + $0xf8] sm:$0xff] %vm1582, %v1549
        %1615 = vst.msk [vmem:[%s163 + $0x100] sm:$0xff] %vm1582, %v1550
        %1616 = vst.msk [vmem:[%s163 + $0x108] sm:$0xff] %vm1582, %v1551
        %1617 = vst.msk [vmem:[%s163 + $0x110] sm:$0xff] %vm1582, %v1552
        %1618 = vst.msk [vmem:[%s163 + $0x118] sm:$0xff] %vm1582, %v1553
        %1619 = vst.msk [vmem:[%s163 + $0x120] sm:$0xff] %vm1582, %v1554
        %1620 = vst.msk [vmem:[%s163 + $0x128] sm:$0xff] %vm1582, %v1555
        %1621 = vst.msk [vmem:[%s163 + $0x130] sm:$0xff] %vm1582, %v1556
        %1622 = vst.msk [vmem:[%s163 + $0x138] sm:$0xff] %vm1582, %v1557
        %1623 = vst.msk [vmem:[%s163 + $0x140] sm:$0xff] %vm1582, %v1558
        %1624 = vst.msk [vmem:[%s163 + $0x148] sm:$0xff] %vm1582, %v1559
        %1625 = vst.msk [vmem:[%s163 + $0x150] sm:$0xff] %vm1582, %v1560
        %1626 = vst.msk [vmem:[%s163 + $0x158] sm:$0xff] %vm1582, %v1561
        %1627 = vst.msk [vmem:[%s163 + $0x160] sm:$0xff] %vm1582, %v1562
        %1628 = vst.msk [vmem:[%s163 + $0x168] sm:$0xff] %vm1582, %v1563
        %1629 = vst.msk [vmem:[%s163 + $0x170] sm:$0xff] %vm1582, %v1564
        %1630 = vst.msk [vmem:[%s163 + $0x178] sm:$0xff] %vm1582, %v1565
        %1631 = vst.msk [vmem:[%s163 + $0x180] sm:$0xff] %vm1582, %v1566
        %1632 = vst.msk [vmem:[%s163 + $0x188] sm:$0xff] %vm1582, %v1567
        %1633 = vst.msk [vmem:[%s163 + $0x190] sm:$0xff] %vm1582, %v1568
        %1634 = vst.msk [vmem:[%s163 + $0x198] sm:$0xff] %vm1582, %v1569
        %1635 = vst.msk [vmem:[%s163 + $0x1a0] sm:$0xff] %vm1582, %v1570
        %1636 = vst.msk [vmem:[%s163 + $0x1a8] sm:$0xff] %vm1582, %v1571
        %1637 = vst.msk [vmem:[%s163 + $0x1b0] sm:$0xff] %vm1582, %v1572
        %1638 = vst.msk [vmem:[%s163 + $0x1b8] sm:$0xff] %vm1582, %v1573
        %1639 = vst.msk [vmem:[%s163 + $0x1c0] sm:$0xff] %vm1582, %v1574
        %1640 = vst.msk [vmem:[%s163 + $0x1c8] sm:$0xff] %vm1582, %v1575
        %1641 = vst.msk [vmem:[%s163 + $0x1d0] sm:$0xff] %vm1582, %v1576
        %1642 = vst.msk [vmem:[%s163 + $0x1d8] sm:$0xff] %vm1582, %v1577
        %1643 = vst.msk [vmem:[%s163 + $0x1e0] sm:$0xff] %vm1582, %v1578
        %1644 = vst.msk [vmem:[%s163 + $0x1e8] sm:$0xff] %vm1582, %v1579
        %1645 = vst.msk [vmem:[%s163 + $0x1f0] sm:$0xff] %vm1582, %v1580
        %1646 = vst.msk [vmem:[%s163 + $0x1f8] sm:$0xff] %vm1582, %v1581
      $region32: #{tpu_custom_call.1} parent=23 // pred_fallthru
        _
      %p1647 = scmp.lt.s32.totalorder %s17, 1
      %s1648 = scalar_select %p1647, %s17, 1
      %p1649 = scmp.lt.s32.totalorder %s18, 0
      %s1650 = scalar_select %p1649, %s18, 0
      %s1651 = smul.addr %s1650, 64
      %s1652 = smul.addr %s1648, 64
      %s1653 = sadd.s32 %s1651, %s1652
      %s1654 = smul.addr %s1653, 8
      %s1655 = scalar_lea.vmem %s1, %s1654
      // Predicated region
      $region33: #{tpu_custom_call.1} parent=23 // pred_check
        %p1656 = pneg %p81
      $region34: #{tpu_custom_call.1} parent=23 // pred_check_branch
        %1658 = sbr.rel (%p1656) target = $region36
      $region35: #{tpu_custom_call.1} parent=23 // pred_region
        _
      $region36: #{tpu_custom_call.1} parent=23 // pred_fallthru
        _
    $region24: #{tpu_custom_call.1} parent=5 // pred_fallthru
      _
    %p1659 = scmp.le.s32.totalorder 2, %s7
    // Predicated region
    $region37: #{tpu_custom_call.1} parent=5 // pred_check
      %p1660 = pneg %p1659
    $region38: #{tpu_custom_call.1} parent=5 // pred_check_branch
      %1662 = sbr.rel (%p1660) target = $region40
    $region39: #{tpu_custom_call.1} parent=5 // pred_region
      %s1663 = ssub.s32 %s7, 2
      // Predicated region
      $region41: #{tpu_custom_call.1} parent=39 // pred_check
        %p1664 = pneg %p87
      $region42: #{tpu_custom_call.1} parent=39 // pred_check_branch
        %1666 = sbr.rel (%p1664) target = $region44
      $region43: #{tpu_custom_call.1} parent=39 // pred_region
        %p1667 = scmp.lt.s32.totalorder %s20, 1
        %s1668 = scalar_select %p1667, %s20, 1
        %p1669 = scmp.lt.s32.totalorder %s21, 0
        %s1670 = scalar_select %p1669, %s21, 0
        %s1671 = smul.addr %s1670, 64
        %s1672 = smul.addr %s1668, 64
        %s1673 = sadd.s32 %s1671, %s1672
        %s1674 = smul.addr %s1673, 8
        %s1675 = scalar_lea.vmem %s1, %s1674
      $region44: #{tpu_custom_call.1} parent=39 // pred_fallthru
        _
    $region40: #{tpu_custom_call.1} parent=5 // pred_fallthru
      _
  $region6: #{tpu_custom_call.1} parent=0 // loop_footer
    %s11 = sadd.s32 1, %s7
  $region7: #{tpu_custom_call.1} parent=0 // loop_footer_branch
    %6 = sbr.rel target = $region3
  $region8: #{tpu_custom_call.1} parent=0 // loop_exit
    _

</llo_original>
